<compile_context>
chip_gen: v5e
topology: v5e:2x2
jax: 0.10.0
libtpu: 0.0.40
codegen_flags: <defaults>
</compile_context>

<pallas_src>
import functools

import jax
import jax.numpy as jnp
from jax.experimental import pallas as pl
from jax.experimental.pallas import tpu as pltpu

_VMEM = pl.BlockSpec(memory_space=pltpu.MemorySpace.VMEM)


# ---------------------------------------------------------------------------
# Shared gate math (PyTorch gate order i, f, g, o)
# ---------------------------------------------------------------------------
def _lstm_gate_math(gates, c_prev):
    H = gates.shape[-1] // 4
    i = jax.nn.sigmoid(gates[:, 0 * H:1 * H])
    f = jax.nn.sigmoid(gates[:, 1 * H:2 * H])
    g = jnp.tanh(gates[:, 2 * H:3 * H])
    o = jax.nn.sigmoid(gates[:, 3 * H:4 * H])
    c_new = f * c_prev + i * g
    h_new = o * jnp.tanh(c_new)
    return h_new, c_new


# ---------------------------------------------------------------------------
# Fused bidirectional LSTM layer: grid=(S,), one launch per layer
# Inputs are the pre-computed input projections (x @ W_ih + b) for each direction.
# ---------------------------------------------------------------------------
def _bilstm_layer_kernel(gfw_ref, gbw_ref, whh_fw_ref, whh_bw_ref,
                         ys_fw_ref, ys_bw_ref,
                         hfw_out, cfw_out, hbw_out, cbw_out,
                         h_fw, c_fw, h_bw, c_bw):
    @pl.when(pl.program_id(0) == 0)
    def _():
        h_fw[...] = jnp.zeros_like(h_fw)
        c_fw[...] = jnp.zeros_like(c_fw)
        h_bw[...] = jnp.zeros_like(h_bw)
        c_bw[...] = jnp.zeros_like(c_bw)

    # forward direction (block t of gfw)
    gates = gfw_ref[0] + jnp.dot(h_fw[...], whh_fw_ref[...],
                                 preferred_element_type=jnp.float32)
    h_new, c_new = _lstm_gate_math(gates, c_fw[...])
    h_fw[...] = h_new
    c_fw[...] = c_new
    ys_fw_ref[0] = h_new
    hfw_out[...] = h_new
    cfw_out[...] = c_new

    # backward direction (block S-1-t of gbw via its index_map)
    gates = gbw_ref[0] + jnp.dot(h_bw[...], whh_bw_ref[...],
                                 preferred_element_type=jnp.float32)
    h_new, c_new = _lstm_gate_math(gates, c_bw[...])
    h_bw[...] = h_new
    c_bw[...] = c_new
    ys_bw_ref[0] = h_new
    hbw_out[...] = h_new
    cbw_out[...] = c_new


def bilstm_layer(gates_fw, gates_bw, w_hh_fw, w_hh_bw):
    S, B, G4 = gates_fw.shape
    He = w_hh_fw.shape[0]
    grid_spec = pltpu.PrefetchScalarGridSpec(
        num_scalar_prefetch=0,
        grid=(S,),
        in_specs=[
            pl.BlockSpec((1, B, G4), lambda t: (t, 0, 0)),           # fw pre-gates
            pl.BlockSpec((1, B, G4), lambda t: (S - 1 - t, 0, 0)),   # bw pre-gates (reversed)
            pl.BlockSpec((He, G4), lambda t: (0, 0)),                # W_hh fw (loaded once)
            pl.BlockSpec((He, G4), lambda t: (0, 0)),                # W_hh bw (loaded once)
        ],
        out_specs=(
            pl.BlockSpec((1, B, He), lambda t: (t, 0, 0)),           # ys_fw
            pl.BlockSpec((1, B, He), lambda t: (S - 1 - t, 0, 0)),   # ys_bw
            pl.BlockSpec((B, He), lambda t: (0, 0)),                 # final h_fw
            pl.BlockSpec((B, He), lambda t: (0, 0)),                 # final c_fw
            pl.BlockSpec((B, He), lambda t: (0, 0)),                 # final h_bw
            pl.BlockSpec((B, He), lambda t: (0, 0)),                 # final c_bw
        ),
        scratch_shapes=[pltpu.VMEM((B, He), jnp.float32)] * 4,
    )
    return pl.pallas_call(
        _bilstm_layer_kernel,
        out_shape=(
            jax.ShapeDtypeStruct((S, B, He), jnp.float32),
            jax.ShapeDtypeStruct((S, B, He), jnp.float32),
            jax.ShapeDtypeStruct((B, He), jnp.float32),
            jax.ShapeDtypeStruct((B, He), jnp.float32),
            jax.ShapeDtypeStruct((B, He), jnp.float32),
            jax.ShapeDtypeStruct((B, He), jnp.float32),
        ),
        grid_spec=grid_spec,
        compiler_params=pltpu.CompilerParams(dimension_semantics=("arbitrary",)),
    )(gates_fw, gates_bw, w_hh_fw, w_hh_bw)


# ---------------------------------------------------------------------------
# Fused decoder: grid=(T,), all LSTM layers + attention + concat + tanh per step.
# h_src, weights, and initial states are DMA'd to VMEM once (constant index_map);
# decoder state and h_tilde live in VMEM scratch across grid iterations.
# ---------------------------------------------------------------------------
def _decoder_step_kernel(pregate_ref, hsrc_ref, wih0t_ref, whh_ref,
                         wih_rest_ref, b_rest_ref, h0_ref, c0_ref,
                         wa_ref, wcd_ref, wcc_ref, bc_ref,
                         out_ref,
                         h_st, c_st, htil_st, *, n_layers):
    @pl.when(pl.program_id(0) == 0)
    def _():
        h_st[...] = h0_ref[...]
        c_st[...] = c0_ref[...]
        htil_st[...] = jnp.zeros_like(htil_st)

    # --- decoder LSTM stack (input feeding: x_0 = [emb_t, h_tilde_{t-1}]) ---
    gates = (pregate_ref[0]
             + jnp.dot(htil_st[...], wih0t_ref[...], preferred_element_type=jnp.float32)
             + jnp.dot(h_st[0], whh_ref[0], preferred_element_type=jnp.float32))
    h_new, c_new = _lstm_gate_math(gates, c_st[0])
    h_st[0] = h_new
    c_st[0] = c_new
    x = h_new
    for l in range(1, n_layers):
        gates = (jnp.dot(x, wih_rest_ref[l - 1], preferred_element_type=jnp.float32)
                 + jnp.dot(h_st[l], whh_ref[l], preferred_element_type=jnp.float32)
                 + b_rest_ref[l - 1])
        h_new, c_new = _lstm_gate_math(gates, c_st[l])
        h_st[l] = h_new
        c_st[l] = c_new
        x = h_new
    dec_out = x                                                   # (B, H)

    # --- attention (unmasked, matching reference semantics) on the MXU ---
    hsrc = hsrc_ref[...]                                          # (B, S, H)
    q = jnp.dot(dec_out, wa_ref[...], preferred_element_type=jnp.float32)   # (B, H)
    # bmm(query, h_src^T):  (B,1,H) x (B,S,H)^T -> (B,1,S)
    scores = jnp.einsum('bth,bsh->bts', q[:, None, :], hsrc,
                        preferred_element_type=jnp.float32)
    m = jnp.max(scores, axis=-1, keepdims=True)
    e = jnp.exp(scores - m)
    w = e * pl.reciprocal(jnp.sum(e, axis=-1, keepdims=True), approx=True)
    # bmm(weights, h_src): (B,1,S) x (B,S,H) -> (B,1,H)
    ctx = jnp.einsum('bts,bsh->bth', w, hsrc,
                     preferred_element_type=jnp.float32)[:, 0, :]  # (B, H)

    # --- tanh(concat([dec_out, ctx]) @ W_concat^T + b) as a split matmul ---
    h_tilde = jnp.tanh(
        jnp.dot(dec_out, wcd_ref[...], preferred_element_type=jnp.float32)
        + jnp.dot(ctx, wcc_ref[...], preferred_element_type=jnp.float32)
        + bc_ref[...])
    htil_st[...] = h_tilde
    out_ref[0] = h_tilde


def decoder_attention_loop(pre_gates, h_src, w_ih0_tilde, w_hh, w_ih_rest, b_rest,
                           h0, c0, wa, wc_dec, wc_ctx, bc, *, n_layers):
    T, B, G4 = pre_gates.shape
    _, S, H = h_src.shape
    L = n_layers
    kernel = functools.partial(_decoder_step_kernel, n_layers=L)
    grid_spec = pltpu.PrefetchScalarGridSpec(
        num_scalar_prefetch=0,
        grid=(T,),
        in_specs=[
            pl.BlockSpec((1, B, G4), lambda t: (t, 0, 0)),            # pre_gates[t]
            pl.BlockSpec((B, S, H), lambda t: (0, 0, 0)),             # h_src (once)
            pl.BlockSpec((H, G4), lambda t: (0, 0)),                  # W_ih0 (h_tilde part)
            pl.BlockSpec((L, H, G4), lambda t: (0, 0, 0)),            # W_hh (all layers)
            pl.BlockSpec(w_ih_rest.shape, lambda t: (0, 0, 0)),       # W_ih layers 1..L-1
            pl.BlockSpec(b_rest.shape, lambda t: (0, 0, 0)),          # b   layers 1..L-1
            pl.BlockSpec((L, B, H), lambda t: (0, 0, 0)),             # initial h
            pl.BlockSpec((L, B, H), lambda t: (0, 0, 0)),             # initial c
            pl.BlockSpec((H, H), lambda t: (0, 0)),                   # W_attn
            pl.BlockSpec((H, H), lambda t: (0, 0)),                   # W_concat (dec half)
            pl.BlockSpec((H, H), lambda t: (0, 0)),                   # W_concat (ctx half)
            pl.BlockSpec((1, H), lambda t: (0, 0)),                   # b_concat
        ],
        out_specs=pl.BlockSpec((1, B, H), lambda t: (t, 0, 0)),
        scratch_shapes=[
            pltpu.VMEM((L, B, H), jnp.float32),   # h state (all layers)
            pltpu.VMEM((L, B, H), jnp.float32),   # c state (all layers)
            pltpu.VMEM((B, H), jnp.float32),      # h_tilde carry
        ],
    )
    return pl.pallas_call(
        kernel,
        out_shape=jax.ShapeDtypeStruct((T, B, H), jnp.float32),
        grid_spec=grid_spec,
        compiler_params=pltpu.CompilerParams(dimension_semantics=("arbitrary",)),
    )(pre_gates, h_src, w_ih0_tilde, w_hh, w_ih_rest, b_rest, h0, c0,
      wa, wc_dec, wc_ctx, bc)


# ---------------------------------------------------------------------------
# Generator: Linear + LogSoftmax(dim=-1)
# TODO(synk): for realistic vocab sizes, tile over (rows, V) with an online-LSE
#             accumulator and pad V to a multiple of 128 (lane-dense stores / v7x VMEM).
# ---------------------------------------------------------------------------
def _generator_kernel(x_ref, w_ref, b_ref, out_ref):
    logits = jnp.dot(x_ref[...], w_ref[...], preferred_element_type=jnp.float32) + b_ref[...]
    m = jnp.max(logits, axis=-1, keepdims=True)
    lse = jnp.log(jnp.sum(jnp.exp(logits - m), axis=-1, keepdims=True)) + m
    out_ref[...] = logits - lse


def generator(x_flat, w, b):
    N = x_flat.shape[0]
    V = w.shape[-1]
    return pl.pallas_call(
        _generator_kernel,
        out_shape=jax.ShapeDtypeStruct((N, V), jnp.float32),
        in_specs=[_VMEM] * 3,
        out_specs=_VMEM,
    )(x_flat, w, b)


# ---------------------------------------------------------------------------
# Parameters (deterministic synthetic init)
# ---------------------------------------------------------------------------
def init_params(key, input_size, embedding_dim, hidden_size, output_size, n_layers):
    enc_hidden = hidden_size // 2
    keys = iter(jax.random.split(key, 256))

    def nrm(shape, scale=0.1):
        return (scale * jax.random.normal(next(keys), shape)).astype(jnp.float32)

    params = {
        "emb_src": nrm((input_size, embedding_dim), 1.0),
        "emb_tgt": nrm((output_size, embedding_dim), 1.0),
    }
    enc = []
    for l in range(n_layers):
        in_l = embedding_dim if l == 0 else 2 * enc_hidden
        layer = {}
        for d in ("fw", "bw"):
            layer[d] = dict(w_ih=nrm((in_l, 4 * enc_hidden)),
                            w_hh=nrm((enc_hidden, 4 * enc_hidden)),
                            b=nrm((1, 4 * enc_hidden)))   # b_ih + b_hh folded together
        enc.append(layer)
    params["encoder"] = enc
    dec = []
    for l in range(n_layers):
        in_l = embedding_dim + hidden_size if l == 0 else hidden_size
        dec.append(dict(w_ih=nrm((in_l, 4 * hidden_size)),
                        w_hh=nrm((hidden_size, 4 * hidden_size)),
                        b=nrm((1, 4 * hidden_size))))
    params["decoder"] = dec
    params["attn_w"] = nrm((hidden_size, hidden_size))         # W_attn^T (no bias)
    params["concat_w_dec"] = nrm((hidden_size, hidden_size))   # first half of concat Linear
    params["concat_w_ctx"] = nrm((hidden_size, hidden_size))   # second half
    params["concat_b"] = nrm((1, hidden_size))
    params["gen_w"] = nrm((hidden_size, output_size))
    params["gen_b"] = nrm((1, output_size))
    return params


# ---------------------------------------------------------------------------
# Model forward
# ---------------------------------------------------------------------------
def encoder_forward(params, emb_src):
    # emb_src: (B, S, E) -> time-major (S, B, E)
    xs = jnp.transpose(emb_src, (1, 0, 2))
    h_list, c_list = [], []
    for layer in params["encoder"]:
        # Hoisted input projections: one matmul over all timesteps per direction.
        g_fw = jnp.einsum('sbi,ig->sbg', xs, layer["fw"]["w_ih"],
                          preferred_element_type=jnp.float32) + layer["fw"]["b"]
        g_bw = jnp.einsum('sbi,ig->sbg', xs, layer["bw"]["w_ih"],
                          preferred_element_type=jnp.float32) + layer["bw"]["b"]
        ys_fw, ys_bw, h_fw, c_fw, h_bw, c_bw = bilstm_layer(
            g_fw, g_bw, layer["fw"]["w_hh"], layer["bw"]["w_hh"])
        xs = jnp.concatenate([ys_fw, ys_bw], axis=-1)            # (S, B, 2*enc_hidden)
        h_list.append(jnp.concatenate([h_fw, h_bw], axis=-1))
        c_list.append(jnp.concatenate([c_fw, c_bw], axis=-1))
    h_src = jnp.transpose(xs, (1, 0, 2))                         # (B, S, hidden)
    dec_h0 = jnp.stack(h_list, 0)                                # (L, B, hidden)
    dec_c0 = jnp.stack(c_list, 0)
    return h_src, dec_h0, dec_c0


def seq2seq_forward(params, src_ids, tgt_ids, hidden_size, n_layers):
    emb_src = jnp.take(params["emb_src"], src_ids, axis=0)       # (B, S, E)
    emb_tgt = jnp.take(params["emb_tgt"], tgt_ids, axis=0)       # (B, T, E)

    h_src, dec_h0, dec_c0 = encoder_forward(params, emb_src)
    B, T, E = emb_tgt.shape
    H = hidden_size
    L = n_layers

    # Hoist the embedding part of the decoder layer-0 input projection out of the loop.
    w_ih0 = params["decoder"][0]["w_ih"]                         # (E+H, 4H)
    w_ih0_emb, w_ih0_tilde = w_ih0[:E], w_ih0[E:]
    pre_gates = jnp.einsum('bte,eg->tbg', emb_tgt, w_ih0_emb,
                           preferred_element_type=jnp.float32) + params["decoder"][0]["b"]

    w_hh = jnp.stack([params["decoder"][l]["w_hh"] for l in range(L)], 0)   # (L, H, 4H)
    if L > 1:
        w_ih_rest = jnp.stack([params["decoder"][l]["w_ih"] for l in range(1, L)], 0)
        b_rest = jnp.stack([params["decoder"][l]["b"] for l in range(1, L)], 0)
    else:
        w_ih_rest = jnp.zeros((1, H, 4 * H), jnp.float32)        # unused placeholder
        b_rest = jnp.zeros((1, 1, 4 * H), jnp.float32)

    h_tilde_tm = decoder_attention_loop(
        pre_gates, h_src, w_ih0_tilde, w_hh, w_ih_rest, b_rest,
        dec_h0, dec_c0, params["attn_w"], params["concat_w_dec"],
        params["concat_w_ctx"], params["concat_b"], n_layers=L)  # (T, B, H)

    h_tilde = jnp.transpose(h_tilde_tm, (1, 0, 2))               # (B, T, H)
    flat = h_tilde.reshape(B * T, H)
    V = params["gen_w"].shape[-1]
    log_probs = generator(flat, params["gen_w"], params["gen_b"])
    return log_probs.reshape(B, T, V)                            # (B, T, output_size)


# ---------------------------------------------------------------------------
if __name__ == "__main__":
    INPUT_SIZE = 17      # src vocab
    OUTPUT_SIZE = 19     # tgt vocab
    EMB_DIM = 16
    HIDDEN = 32
    N_LAYERS = 2
    B, S, T = 2, 8, 6

    key = jax.random.PRNGKey(0)
    kp, ks, kt = jax.random.split(key, 3)
    params = init_params(kp, INPUT_SIZE, EMB_DIM, HIDDEN, OUTPUT_SIZE, N_LAYERS)
    src = jax.random.randint(ks, (B, S), 0, INPUT_SIZE, dtype=jnp.int32)
    tgt = jax.random.randint(kt, (B, T), 0, OUTPUT_SIZE, dtype=jnp.int32)
    # x_length = full lengths for all rows -> pack/unpack are identities and the
    # generated mask is a no-op in the reference anyway.

    fwd = jax.jit(functools.partial(seq2seq_forward, hidden_size=HIDDEN, n_layers=N_LAYERS))
    y_hat = fwd(params, src, tgt)
    jax.block_until_ready(y_hat)

    assert y_hat.shape == (B, T, OUTPUT_SIZE)
    assert bool(jnp.all(jnp.isfinite(y_hat)))
    # rows of log_softmax should exp-sum to 1
    assert bool(jnp.allclose(jnp.exp(y_hat).sum(-1), 1.0, atol=1e-4))
    print("KERNEL_OK")
</pallas_src>

<mosaic_0001>
module attributes {stable_mosaic.version = 11 : i64} {
  func.func @_bilstm_layer_kernel(%arg0: i32, %arg1: memref<1x2x64xf32, #tpu.memory_space<vmem>>, %arg2: memref<1x2x64xf32, #tpu.memory_space<vmem>>, %arg3: memref<16x64xf32, #tpu.memory_space<vmem>>, %arg4: memref<16x64xf32, #tpu.memory_space<vmem>>, %arg5: memref<1x2x16xf32, #tpu.memory_space<vmem>>, %arg6: memref<1x2x16xf32, #tpu.memory_space<vmem>>, %arg7: memref<2x16xf32, #tpu.memory_space<vmem>>, %arg8: memref<2x16xf32, #tpu.memory_space<vmem>>, %arg9: memref<2x16xf32, #tpu.memory_space<vmem>>, %arg10: memref<2x16xf32, #tpu.memory_space<vmem>>, %arg11: memref<2x16xf32, #tpu.memory_space<vmem>>, %arg12: memref<2x16xf32, #tpu.memory_space<vmem>>, %arg13: memref<2x16xf32, #tpu.memory_space<vmem>>, %arg14: memref<2x16xf32, #tpu.memory_space<vmem>>) attributes {dimension_semantics = [#tpu.dimension_semantics<arbitrary>], iteration_bounds = array<i64: 8>, scalar_prefetch = 0 : i64, scratch_operands = 4 : i64, tpu.core_type = #tpu.core_type<tc>, window_params = [{transform_indices = @transform_0, window_bounds = array<i64: 1, 2, 64>}, {transform_indices = @transform_1, window_bounds = array<i64: 1, 2, 64>}, {pipeline_mode = #tpu.pipeline_mode<synchronous>, transform_indices = @transform_2, window_bounds = array<i64: 16, 64>}, {pipeline_mode = #tpu.pipeline_mode<synchronous>, transform_indices = @transform_3, window_bounds = array<i64: 16, 64>}, {transform_indices = @transform_4, window_bounds = array<i64: 1, 2, 16>}, {transform_indices = @transform_5, window_bounds = array<i64: 1, 2, 16>}, {pipeline_mode = #tpu.pipeline_mode<synchronous>, transform_indices = @transform_6, window_bounds = array<i64: 2, 16>}, {pipeline_mode = #tpu.pipeline_mode<synchronous>, transform_indices = @transform_7, window_bounds = array<i64: 2, 16>}, {pipeline_mode = #tpu.pipeline_mode<synchronous>, transform_indices = @transform_8, window_bounds = array<i64: 2, 16>}, {pipeline_mode = #tpu.pipeline_mode<synchronous>, transform_indices = @transform_9, window_bounds = array<i64: 2, 16>}]} {
    %c0_i32 = arith.constant 0 : i32
    %0 = arith.cmpi eq, %arg0, %c0_i32 : i32
    %1 = arith.extui %0 : i1 to i32
    %c0_i32_0 = arith.constant 0 : i32
    %2 = arith.cmpi ne, %1, %c0_i32_0 : i32
    scf.if %2 {
      %cst_47 = arith.constant 0.000000e+00 : f32
      %81 = vector.broadcast %cst_47 : f32 to vector<2x16xf32>
      %c0_48 = arith.constant 0 : index
      %c0_49 = arith.constant 0 : index
      %82 = vector.load %arg11[%c0_48, %c0_49] : memref<2x16xf32, #tpu.memory_space<vmem>>, vector<2x16xf32>
      tpu.vector_store %arg11[%c0_48, %c0_49], %81 {strides = array<i32>} : memref<2x16xf32, #tpu.memory_space<vmem>>, vector<2x16xf32>,
      %cst_50 = arith.constant 0.000000e+00 : f32
      %83 = vector.broadcast %cst_50 : f32 to vector<2x16xf32>
      %c0_51 = arith.constant 0 : index
      %c0_52 = arith.constant 0 : index
      %84 = vector.load %arg12[%c0_51, %c0_52] : memref<2x16xf32, #tpu.memory_space<vmem>>, vector<2x16xf32>
      tpu.vector_store %arg12[%c0_51, %c0_52], %83 {strides = array<i32>} : memref<2x16xf32, #tpu.memory_space<vmem>>, vector<2x16xf32>,
      %cst_53 = arith.constant 0.000000e+00 : f32
      %85 = vector.broadcast %cst_53 : f32 to vector<2x16xf32>
      %c0_54 = arith.constant 0 : index
      %c0_55 = arith.constant 0 : index
      %86 = vector.load %arg13[%c0_54, %c0_55] : memref<2x16xf32, #tpu.memory_space<vmem>>, vector<2x16xf32>
      tpu.vector_store %arg13[%c0_54, %c0_55], %85 {strides = array<i32>} : memref<2x16xf32, #tpu.memory_space<vmem>>, vector<2x16xf32>,
      %cst_56 = arith.constant 0.000000e+00 : f32
      %87 = vector.broadcast %cst_56 : f32 to vector<2x16xf32>
      %c0_57 = arith.constant 0 : index
      %c0_58 = arith.constant 0 : index
      %88 = vector.load %arg14[%c0_57, %c0_58] : memref<2x16xf32, #tpu.memory_space<vmem>>, vector<2x16xf32>
      tpu.vector_store %arg14[%c0_57, %c0_58], %87 {strides = array<i32>} : memref<2x16xf32, #tpu.memory_space<vmem>>, vector<2x16xf32>,
    } else {
    }
    %c0 = arith.constant 0 : index
    %c0_1 = arith.constant 0 : index
    %c0_2 = arith.constant 0 : index
    %3 = vector.load %arg1[%c0, %c0_1, %c0_2] : memref<1x2x64xf32, #tpu.memory_space<vmem>>, vector<1x2x64xf32>
    %4 = vector.shape_cast %3 : vector<1x2x64xf32> to vector<2x64xf32>
    %c0_3 = arith.constant 0 : index
    %c0_4 = arith.constant 0 : index
    %5 = vector.load %arg11[%c0_3, %c0_4] : memref<2x16xf32, #tpu.memory_space<vmem>>, vector<2x16xf32>
    %c0_5 = arith.constant 0 : index
    %c0_6 = arith.constant 0 : index
    %6 = vector.load %arg3[%c0_5, %c0_6] : memref<16x64xf32, #tpu.memory_space<vmem>>, vector<16x64xf32>
    %cst = arith.constant dense<0.000000e+00> : vector<2x64xf32>
    %7 = tpu.matmul %5, %6, %cst {dimension_numbers = #tpu.dot_dimension_numbers<[1], [0], [0], [1], [0, 0, 1, 1], [], []>} : vector<2x16xf32>, vector<16x64xf32>, vector<2x64xf32> -> vector<2x64xf32>
    %8 = arith.addf %4, %7 : vector<2x64xf32>
    %c0_7 = arith.constant 0 : index
    %c0_8 = arith.constant 0 : index
    %9 = vector.load %arg12[%c0_7, %c0_8] : memref<2x16xf32, #tpu.memory_space<vmem>>, vector<2x16xf32>
    %10 = vector.extract_strided_slice %8 {offsets = [0, 0], sizes = [2, 16], strides = [1, 1]} : vector<2x64xf32> to vector<2x16xf32>
    %11 = arith.negf %10 : vector<2x16xf32>
    %12 = math.exp %11 : vector<2x16xf32>
    %cst_9 = arith.constant 1.000000e+00 : f32
    %13 = vector.broadcast %cst_9 : f32 to vector<2x16xf32>
    %14 = arith.addf %13, %12 : vector<2x16xf32>
    %15 = arith.divf %13, %14 : vector<2x16xf32>
    %16 = vector.extract_strided_slice %8 {offsets = [0, 16], sizes = [2, 16], strides = [1, 1]} : vector<2x64xf32> to vector<2x16xf32>
    %17 = arith.negf %16 : vector<2x16xf32>
    %18 = math.exp %17 : vector<2x16xf32>
    %cst_10 = arith.constant 1.000000e+00 : f32
    %19 = vector.broadcast %cst_10 : f32 to vector<2x16xf32>
    %20 = arith.addf %19, %18 : vector<2x16xf32>
    %21 = arith.divf %19, %20 : vector<2x16xf32>
    %22 = vector.extract_strided_slice %8 {offsets = [0, 32], sizes = [2, 16], strides = [1, 1]} : vector<2x64xf32> to vector<2x16xf32>
    %23 = math.tanh %22 : vector<2x16xf32>
    %24 = vector.extract_strided_slice %8 {offsets = [0, 48], sizes = [2, 16], strides = [1, 1]} : vector<2x64xf32> to vector<2x16xf32>
    %25 = arith.negf %24 : vector<2x16xf32>
    %26 = math.exp %25 : vector<2x16xf32>
    %cst_11 = arith.constant 1.000000e+00 : f32
    %27 = vector.broadcast %cst_11 : f32 to vector<2x16xf32>
    %28 = arith.addf %27, %26 : vector<2x16xf32>
    %29 = arith.divf %27, %28 : vector<2x16xf32>
    %30 = arith.mulf %21, %9 : vector<2x16xf32>
    %31 = arith.mulf %15, %23 : vector<2x16xf32>
    %32 = arith.addf %30, %31 : vector<2x16xf32>
    %33 = math.tanh %32 : vector<2x16xf32>
    %34 = arith.mulf %29, %33 : vector<2x16xf32>
    %c0_12 = arith.constant 0 : index
    %c0_13 = arith.constant 0 : index
    %35 = vector.load %arg11[%c0_12, %c0_13] : memref<2x16xf32, #tpu.memory_space<vmem>>, vector<2x16xf32>
    tpu.vector_store %arg11[%c0_12, %c0_13], %34 {strides = array<i32>} : memref<2x16xf32, #tpu.memory_space<vmem>>, vector<2x16xf32>,
    %c0_14 = arith.constant 0 : index
    %c0_15 = arith.constant 0 : index
    %36 = vector.load %arg12[%c0_14, %c0_15] : memref<2x16xf32, #tpu.memory_space<vmem>>, vector<2x16xf32>
    tpu.vector_store %arg12[%c0_14, %c0_15], %32 {strides = array<i32>} : memref<2x16xf32, #tpu.memory_space<vmem>>, vector<2x16xf32>,
    %c0_16 = arith.constant 0 : index
    %c0_17 = arith.constant 0 : index
    %c0_18 = arith.constant 0 : index
    %37 = vector.load %arg5[%c0_16, %c0_17, %c0_18] : memref<1x2x16xf32, #tpu.memory_space<vmem>>, vector<1x2x16xf32>
    %38 = vector.shape_cast %37 : vector<1x2x16xf32> to vector<2x16xf32>
    %39 = vector.shape_cast %34 : vector<2x16xf32> to vector<1x2x16xf32>
    tpu.vector_store %arg5[%c0_16, %c0_17, %c0_18], %39 {strides = array<i32>} : memref<1x2x16xf32, #tpu.memory_space<vmem>>, vector<1x2x16xf32>,
    %c0_19 = arith.constant 0 : index
    %c0_20 = arith.constant 0 : index
    %40 = vector.load %arg7[%c0_19, %c0_20] : memref<2x16xf32, #tpu.memory_space<vmem>>, vector<2x16xf32>
    tpu.vector_store %arg7[%c0_19, %c0_20], %34 {strides = array<i32>} : memref<2x16xf32, #tpu.memory_space<vmem>>, vector<2x16xf32>,
    %c0_21 = arith.constant 0 : index
    %c0_22 = arith.constant 0 : index
    %41 = vector.load %arg8[%c0_21, %c0_22] : memref<2x16xf32, #tpu.memory_space<vmem>>, vector<2x16xf32>
    tpu.vector_store %arg8[%c0_21, %c0_22], %32 {strides = array<i32>} : memref<2x16xf32, #tpu.memory_space<vmem>>, vector<2x16xf32>,
    %c0_23 = arith.constant 0 : index
    %c0_24 = arith.constant 0 : index
    %c0_25 = arith.constant 0 : index
    %42 = vector.load %arg2[%c0_23, %c0_24, %c0_25] : memref<1x2x64xf32, #tpu.memory_space<vmem>>, vector<1x2x64xf32>
    %43 = vector.shape_cast %42 : vector<1x2x64xf32> to vector<2x64xf32>
    %c0_26 = arith.constant 0 : index
    %c0_27 = arith.constant 0 : index
    %44 = vector.load %arg13[%c0_26, %c0_27] : memref<2x16xf32, #tpu.memory_space<vmem>>, vector<2x16xf32>
    %c0_28 = arith.constant 0 : index
    %c0_29 = arith.constant 0 : index
    %45 = vector.load %arg4[%c0_28, %c0_29] : memref<16x64xf32, #tpu.memory_space<vmem>>, vector<16x64xf32>
    %cst_30 = arith.constant dense<0.000000e+00> : vector<2x64xf32>
    %46 = tpu.matmul %44, %45, %cst_30 {dimension_numbers = #tpu.dot_dimension_numbers<[1], [0], [0], [1], [0, 0, 1, 1], [], []>} : vector<2x16xf32>, vector<16x64xf32>, vector<2x64xf32> -> vector<2x64xf32>
    %47 = arith.addf %43, %46 : vector<2x64xf32>
    %c0_31 = arith.constant 0 : index
    %c0_32 = arith.constant 0 : index
    %48 = vector.load %arg14[%c0_31, %c0_32] : memref<2x16xf32, #tpu.memory_space<vmem>>, vector<2x16xf32>
    %49 = vector.extract_strided_slice %47 {offsets = [0, 0], sizes = [2, 16], strides = [1, 1]} : vector<2x64xf32> to vector<2x16xf32>
    %50 = arith.negf %49 : vector<2x16xf32>
    %51 = math.exp %50 : vector<2x16xf32>
    %cst_33 = arith.constant 1.000000e+00 : f32
    %52 = vector.broadcast %cst_33 : f32 to vector<2x16xf32>
    %53 = arith.addf %52, %51 : vector<2x16xf32>
    %54 = arith.divf %52, %53 : vector<2x16xf32>
    %55 = vector.extract_strided_slice %47 {offsets = [0, 16], sizes = [2, 16], strides = [1, 1]} : vector<2x64xf32> to vector<2x16xf32>
    %56 = arith.negf %55 : vector<2x16xf32>
    %57 = math.exp %56 : vector<2x16xf32>
    %cst_34 = arith.constant 1.000000e+00 : f32
    %58 = vector.broadcast %cst_34 : f32 to vector<2x16xf32>
    %59 = arith.addf %58, %57 : vector<2x16xf32>
    %60 = arith.divf %58, %59 : vector<2x16xf32>
    %61 = vector.extract_strided_slice %47 {offsets = [0, 32], sizes = [2, 16], strides = [1, 1]} : vector<2x64xf32> to vector<2x16xf32>
    %62 = math.tanh %61 : vector<2x16xf32>
    %63 = vector.extract_strided_slice %47 {offsets = [0, 48], sizes = [2, 16], strides = [1, 1]} : vector<2x64xf32> to vector<2x16xf32>
    %64 = arith.negf %63 : vector<2x16xf32>
    %65 = math.exp %64 : vector<2x16xf32>
    %cst_35 = arith.constant 1.000000e+00 : f32
    %66 = vector.broadcast %cst_35 : f32 to vector<2x16xf32>
    %67 = arith.addf %66, %65 : vector<2x16xf32>
    %68 = arith.divf %66, %67 : vector<2x16xf32>
    %69 = arith.mulf %60, %48 : vector<2x16xf32>
    %70 = arith.mulf %54, %62 : vector<2x16xf32>
    %71 = arith.addf %69, %70 : vector<2x16xf32>
    %72 = math.tanh %71 : vector<2x16xf32>
    %73 = arith.mulf %68, %72 : vector<2x16xf32>
    %c0_36 = arith.constant 0 : index
    %c0_37 = arith.constant 0 : index
    %74 = vector.load %arg13[%c0_36, %c0_37] : memref<2x16xf32, #tpu.memory_space<vmem>>, vector<2x16xf32>
    tpu.vector_store %arg13[%c0_36, %c0_37], %73 {strides = array<i32>} : memref<2x16xf32, #tpu.memory_space<vmem>>, vector<2x16xf32>,
    %c0_38 = arith.constant 0 : index
    %c0_39 = arith.constant 0 : index
    %75 = vector.load %arg14[%c0_38, %c0_39] : memref<2x16xf32, #tpu.memory_space<vmem>>, vector<2x16xf32>
    tpu.vector_store %arg14[%c0_38, %c0_39], %71 {strides = array<i32>} : memref<2x16xf32, #tpu.memory_space<vmem>>, vector<2x16xf32>,
    %c0_40 = arith.constant 0 : index
    %c0_41 = arith.constant 0 : index
    %c0_42 = arith.constant 0 : index
    %76 = vector.load %arg6[%c0_40, %c0_41, %c0_42] : memref<1x2x16xf32, #tpu.memory_space<vmem>>, vector<1x2x16xf32>
    %77 = vector.shape_cast %76 : vector<1x2x16xf32> to vector<2x16xf32>
    %78 = vector.shape_cast %73 : vector<2x16xf32> to vector<1x2x16xf32>
    tpu.vector_store %arg6[%c0_40, %c0_41, %c0_42], %78 {strides = array<i32>} : memref<1x2x16xf32, #tpu.memory_space<vmem>>, vector<1x2x16xf32>,
    %c0_43 = arith.constant 0 : index
    %c0_44 = arith.constant 0 : index
    %79 = vector.load %arg9[%c0_43, %c0_44] : memref<2x16xf32, #tpu.memory_space<vmem>>, vector<2x16xf32>
    tpu.vector_store %arg9[%c0_43, %c0_44], %73 {strides = array<i32>} : memref<2x16xf32, #tpu.memory_space<vmem>>, vector<2x16xf32>,
    %c0_45 = arith.constant 0 : index
    %c0_46 = arith.constant 0 : index
    %80 = vector.load %arg10[%c0_45, %c0_46] : memref<2x16xf32, #tpu.memory_space<vmem>>, vector<2x16xf32>
    tpu.vector_store %arg10[%c0_45, %c0_46], %71 {strides = array<i32>} : memref<2x16xf32, #tpu.memory_space<vmem>>, vector<2x16xf32>,
    return
  }
  func.func @transform_0(%arg0: i32) -> (i32, i32, i32) {
    %c0_i32 = arith.constant 0 : i32
    %c0_i32_0 = arith.constant 0 : i32
    %c0_i32_1 = arith.constant 0 : i32
    return %arg0, %c0_i32, %c0_i32_0 : i32, i32, i32
  }
  func.func @transform_1(%arg0: i32) -> (i32, i32, i32) {
    %c7_i32 = arith.constant 7 : i32
    %0 = arith.subi %c7_i32, %arg0 : i32
    %c0_i32 = arith.constant 0 : i32
    %c0_i32_0 = arith.constant 0 : i32
    %c0_i32_1 = arith.constant 0 : i32
    return %0, %c0_i32, %c0_i32_0 : i32, i32, i32
  }
  func.func @transform_2(%arg0: i32) -> (i32, i32) {
    %c0_i32 = arith.constant 0 : i32
    %c0_i32_0 = arith.constant 0 : i32
    %c0_i32_1 = arith.constant 0 : i32
    return %c0_i32, %c0_i32_0 : i32, i32
  }
  func.func @transform_3(%arg0: i32) -> (i32, i32) {
    %c0_i32 = arith.constant 0 : i32
    %c0_i32_0 = arith.constant 0 : i32
    %c0_i32_1 = arith.constant 0 : i32
    return %c0_i32, %c0_i32_0 : i32, i32
  }
  func.func @transform_4(%arg0: i32) -> (i32, i32, i32) {
    %c0_i32 = arith.constant 0 : i32
    %c0_i32_0 = arith.constant 0 : i32
    %c0_i32_1 = arith.constant 0 : i32
    return %arg0, %c0_i32, %c0_i32_0 : i32, i32, i32
  }
  func.func @transform_5(%arg0: i32) -> (i32, i32, i32) {
    %c7_i32 = arith.constant 7 : i32
    %0 = arith.subi %c7_i32, %arg0 : i32
    %c0_i32 = arith.constant 0 : i32
    %c0_i32_0 = arith.constant 0 : i32
    %c0_i32_1 = arith.constant 0 : i32
    return %0, %c0_i32, %c0_i32_0 : i32, i32, i32
  }
  func.func @transform_6(%arg0: i32) -> (i32, i32) {
    %c0_i32 = arith.constant 0 : i32
    %c0_i32_0 = arith.constant 0 : i32
    %c0_i32_1 = arith.constant 0 : i32
    return %c0_i32, %c0_i32_0 : i32, i32
  }
  func.func @transform_7(%arg0: i32) -> (i32, i32) {
    %c0_i32 = arith.constant 0 : i32
    %c0_i32_0 = arith.constant 0 : i32
    %c0_i32_1 = arith.constant 0 : i32
    return %c0_i32, %c0_i32_0 : i32, i32
  }
  func.func @transform_8(%arg0: i32) -> (i32, i32) {
    %c0_i32 = arith.constant 0 : i32
    %c0_i32_0 = arith.constant 0 : i32
    %c0_i32_1 = arith.constant 0 : i32
    return %c0_i32, %c0_i32_0 : i32, i32
  }
  func.func @transform_9(%arg0: i32) -> (i32, i32) {
    %c0_i32 = arith.constant 0 : i32
    %c0_i32_0 = arith.constant 0 : i32
    %c0_i32_1 = arith.constant 0 : i32
    return %c0_i32, %c0_i32_0 : i32, i32
  }
}

module attributes {stable_mosaic.version = 11 : i64} {
  func.func @_decoder_step_kernel(%arg0: i32, %arg1: memref<1x2x128xf32, #tpu.memory_space<vmem>>, %arg2: memref<2x8x32xf32, #tpu.memory_space<vmem>>, %arg3: memref<32x128xf32, #tpu.memory_space<vmem>>, %arg4: memref<2x32x128xf32, #tpu.memory_space<vmem>>, %arg5: memref<1x32x128xf32, #tpu.memory_space<vmem>>, %arg6: memref<1x1x128xf32, #tpu.memory_space<vmem>>, %arg7: memref<2x2x32xf32, #tpu.memory_space<vmem>>, %arg8: memref<2x2x32xf32, #tpu.memory_space<vmem>>, %arg9: memref<32x32xf32, #tpu.memory_space<vmem>>, %arg10: memref<32x32xf32, #tpu.memory_space<vmem>>, %arg11: memref<32x32xf32, #tpu.memory_space<vmem>>, %arg12: memref<1x32xf32, #tpu.memory_space<vmem>>, %arg13: memref<1x2x32xf32, #tpu.memory_space<vmem>>, %arg14: memref<2x2x32xf32, #tpu.memory_space<vmem>>, %arg15: memref<2x2x32xf32, #tpu.memory_space<vmem>>, %arg16: memref<2x32xf32, #tpu.memory_space<vmem>>) attributes {dimension_semantics = [#tpu.dimension_semantics<arbitrary>], iteration_bounds = array<i64: 6>, scalar_prefetch = 0 : i64, scratch_operands = 3 : i64, tpu.core_type = #tpu.core_type<tc>, window_params = [{transform_indices = @transform_0, window_bounds = array<i64: 1, 2, 128>}, {pipeline_mode = #tpu.pipeline_mode<synchronous>, transform_indices = @transform_1, window_bounds = array<i64: 2, 8, 32>}, {pipeline_mode = #tpu.pipeline_mode<synchronous>, transform_indices = @transform_2, window_bounds = array<i64: 32, 128>}, {pipeline_mode = #tpu.pipeline_mode<synchronous>, transform_indices = @transform_3, window_bounds = array<i64: 2, 32, 128>}, {pipeline_mode = #tpu.pipeline_mode<synchronous>, transform_indices = @transform_4, window_bounds = array<i64: 1, 32, 128>}, {pipeline_mode = #tpu.pipeline_mode<synchronous>, transform_indices = @transform_5, window_bounds = array<i64: 1, 1, 128>}, {pipeline_mode = #tpu.pipeline_mode<synchronous>, transform_indices = @transform_6, window_bounds = array<i64: 2, 2, 32>}, {pipeline_mode = #tpu.pipeline_mode<synchronous>, transform_indices = @transform_7, window_bounds = array<i64: 2, 2, 32>}, {pipeline_mode = #tpu.pipeline_mode<synchronous>, transform_indices = @transform_8, window_bounds = array<i64: 32, 32>}, {pipeline_mode = #tpu.pipeline_mode<synchronous>, transform_indices = @transform_9, window_bounds = array<i64: 32, 32>}, {pipeline_mode = #tpu.pipeline_mode<synchronous>, transform_indices = @transform_10, window_bounds = array<i64: 32, 32>}, {pipeline_mode = #tpu.pipeline_mode<synchronous>, transform_indices = @transform_11, window_bounds = array<i64: 1, 32>}, {transform_indices = @transform_12, window_bounds = array<i64: 1, 2, 32>}]} {
    %c0_i32 = arith.constant 0 : i32
    %0 = arith.cmpi eq, %arg0, %c0_i32 : i32
    %1 = arith.extui %0 : i1 to i32
    %c0_i32_0 = arith.constant 0 : i32
    %2 = arith.cmpi ne, %1, %c0_i32_0 : i32
    scf.if %2 {
      %c0_74 = arith.constant 0 : index
      %c0_75 = arith.constant 0 : index
      %c0_76 = arith.constant 0 : index
      %124 = vector.load %arg7[%c0_74, %c0_75, %c0_76] : memref<2x2x32xf32, #tpu.memory_space<vmem>>, vector<2x2x32xf32>
      %c0_77 = arith.constant 0 : index
      %c0_78 = arith.constant 0 : index
      %c0_79 = arith.constant 0 : index
      %125 = vector.load %arg14[%c0_77, %c0_78, %c0_79] : memref<2x2x32xf32, #tpu.memory_space<vmem>>, vector<2x2x32xf32>
      tpu.vector_store %arg14[%c0_77, %c0_78, %c0_79], %124 {strides = array<i32>} : memref<2x2x32xf32, #tpu.memory_space<vmem>>, vector<2x2x32xf32>,
      %c0_80 = arith.constant 0 : index
      %c0_81 = arith.constant 0 : index
      %c0_82 = arith.constant 0 : index
      %126 = vector.load %arg8[%c0_80, %c0_81, %c0_82] : memref<2x2x32xf32, #tpu.memory_space<vmem>>, vector<2x2x32xf32>
      %c0_83 = arith.constant 0 : index
      %c0_84 = arith.constant 0 : index
      %c0_85 = arith.constant 0 : index
      %127 = vector.load %arg15[%c0_83, %c0_84, %c0_85] : memref<2x2x32xf32, #tpu.memory_space<vmem>>, vector<2x2x32xf32>
      tpu.vector_store %arg15[%c0_83, %c0_84, %c0_85], %126 {strides = array<i32>} : memref<2x2x32xf32, #tpu.memory_space<vmem>>, vector<2x2x32xf32>,
      %cst_86 = arith.constant 0.000000e+00 : f32
      %128 = vector.broadcast %cst_86 : f32 to vector<2x32xf32>
      %c0_87 = arith.constant 0 : index
      %c0_88 = arith.constant 0 : index
      %129 = vector.load %arg16[%c0_87, %c0_88] : memref<2x32xf32, #tpu.memory_space<vmem>>, vector<2x32xf32>
      tpu.vector_store %arg16[%c0_87, %c0_88], %128 {strides = array<i32>} : memref<2x32xf32, #tpu.memory_space<vmem>>, vector<2x32xf32>,
    } else {
    }
    %c0 = arith.constant 0 : index
    %c0_1 = arith.constant 0 : index
    %c0_2 = arith.constant 0 : index
    %3 = vector.load %arg1[%c0, %c0_1, %c0_2] : memref<1x2x128xf32, #tpu.memory_space<vmem>>, vector<1x2x128xf32>
    %4 = vector.shape_cast %3 : vector<1x2x128xf32> to vector<2x128xf32>
    %c0_3 = arith.constant 0 : index
    %c0_4 = arith.constant 0 : index
    %5 = vector.load %arg16[%c0_3, %c0_4] : memref<2x32xf32, #tpu.memory_space<vmem>>, vector<2x32xf32>
    %c0_5 = arith.constant 0 : index
    %c0_6 = arith.constant 0 : index
    %6 = vector.load %arg3[%c0_5, %c0_6] : memref<32x128xf32, #tpu.memory_space<vmem>>, vector<32x128xf32>
    %cst = arith.constant dense<0.000000e+00> : vector<2x128xf32>
    %7 = tpu.matmul %5, %6, %cst {dimension_numbers = #tpu.dot_dimension_numbers<[1], [0], [0], [1], [0, 0, 1, 1], [], []>} : vector<2x32xf32>, vector<32x128xf32>, vector<2x128xf32> -> vector<2x128xf32>
    %8 = arith.addf %4, %7 : vector<2x128xf32>
    %c0_7 = arith.constant 0 : index
    %c0_8 = arith.constant 0 : index
    %c0_9 = arith.constant 0 : index
    %9 = vector.load %arg14[%c0_7, %c0_8, %c0_9] : memref<2x2x32xf32, #tpu.memory_space<vmem>>, vector<1x2x32xf32>
    %10 = vector.shape_cast %9 : vector<1x2x32xf32> to vector<2x32xf32>
    %c0_10 = arith.constant 0 : index
    %c0_11 = arith.constant 0 : index
    %c0_12 = arith.constant 0 : index
    %11 = vector.load %arg4[%c0_10, %c0_11, %c0_12] : memref<2x32x128xf32, #tpu.memory_space<vmem>>, vector<1x32x128xf32>
    %12 = vector.shape_cast %11 : vector<1x32x128xf32> to vector<32x128xf32>
    %cst_13 = arith.constant dense<0.000000e+00> : vector<2x128xf32>
    %13 = tpu.matmul %10, %12, %cst_13 {dimension_numbers = #tpu.dot_dimension_numbers<[1], [0], [0], [1], [0, 0, 1, 1], [], []>} : vector<2x32xf32>, vector<32x128xf32>, vector<2x128xf32> -> vector<2x128xf32>
    %14 = arith.addf %8, %13 : vector<2x128xf32>
    %c0_14 = arith.constant 0 : index
    %c0_15 = arith.constant 0 : index
    %c0_16 = arith.constant 0 : index
    %15 = vector.load %arg15[%c0_14, %c0_15, %c0_16] : memref<2x2x32xf32, #tpu.memory_space<vmem>>, vector<1x2x32xf32>
    %16 = vector.shape_cast %15 : vector<1x2x32xf32> to vector<2x32xf32>
    %17 = vector.extract_strided_slice %14 {offsets = [0, 0], sizes = [2, 32], strides = [1, 1]} : vector<2x128xf32> to vector<2x32xf32>
    %18 = arith.negf %17 : vector<2x32xf32>
    %19 = math.exp %18 : vector<2x32xf32>
    %cst_17 = arith.constant 1.000000e+00 : f32
    %20 = vector.broadcast %cst_17 : f32 to vector<2x32xf32>
    %21 = arith.addf %20, %19 : vector<2x32xf32>
    %22 = arith.divf %20, %21 : vector<2x32xf32>
    %23 = vector.extract_strided_slice %14 {offsets = [0, 32], sizes = [2, 32], strides = [1, 1]} : vector<2x128xf32> to vector<2x32xf32>
    %24 = arith.negf %23 : vector<2x32xf32>
    %25 = math.exp %24 : vector<2x32xf32>
    %cst_18 = arith.constant 1.000000e+00 : f32
    %26 = vector.broadcast %cst_18 : f32 to vector<2x32xf32>
    %27 = arith.addf %26, %25 : vector<2x32xf32>
    %28 = arith.divf %26, %27 : vector<2x32xf32>
    %29 = vector.extract_strided_slice %14 {offsets = [0, 64], sizes = [2, 32], strides = [1, 1]} : vector<2x128xf32> to vector<2x32xf32>
    %30 = math.tanh %29 : vector<2x32xf32>
    %31 = vector.extract_strided_slice %14 {offsets = [0, 96], sizes = [2, 32], strides = [1, 1]} : vector<2x128xf32> to vector<2x32xf32>
    %32 = arith.negf %31 : vector<2x32xf32>
    %33 = math.exp %32 : vector<2x32xf32>
    %cst_19 = arith.constant 1.000000e+00 : f32
    %34 = vector.broadcast %cst_19 : f32 to vector<2x32xf32>
    %35 = arith.addf %34, %33 : vector<2x32xf32>
    %36 = arith.divf %34, %35 : vector<2x32xf32>
    %37 = arith.mulf %28, %16 : vector<2x32xf32>
    %38 = arith.mulf %22, %30 : vector<2x32xf32>
    %39 = arith.addf %37, %38 : vector<2x32xf32>
    %40 = math.tanh %39 : vector<2x32xf32>
    %41 = arith.mulf %36, %40 : vector<2x32xf32>
    %c0_20 = arith.constant 0 : index
    %c0_21 = arith.constant 0 : index
    %c0_22 = arith.constant 0 : index
    %42 = vector.load %arg14[%c0_20, %c0_21, %c0_22] : memref<2x2x32xf32, #tpu.memory_space<vmem>>, vector<1x2x32xf32>
    %43 = vector.shape_cast %42 : vector<1x2x32xf32> to vector<2x32xf32>
    %44 = vector.shape_cast %41 : vector<2x32xf32> to vector<1x2x32xf32>
    tpu.vector_store %arg14[%c0_20, %c0_21, %c0_22], %44 {strides = array<i32>} : memref<2x2x32xf32, #tpu.memory_space<vmem>>, vector<1x2x32xf32>,
    %c0_23 = arith.constant 0 : index
    %c0_24 = arith.constant 0 : index
    %c0_25 = arith.constant 0 : index
    %45 = vector.load %arg15[%c0_23, %c0_24, %c0_25] : memref<2x2x32xf32, #tpu.memory_space<vmem>>, vector<1x2x32xf32>
    %46 = vector.shape_cast %45 : vector<1x2x32xf32> to vector<2x32xf32>
    %47 = vector.shape_cast %39 : vector<2x32xf32> to vector<1x2x32xf32>
    tpu.vector_store %arg15[%c0_23, %c0_24, %c0_25], %47 {strides = array<i32>} : memref<2x2x32xf32, #tpu.memory_space<vmem>>, vector<1x2x32xf32>,
    %c0_26 = arith.constant 0 : index
    %c0_27 = arith.constant 0 : index
    %c0_28 = arith.constant 0 : index
    %48 = vector.load %arg5[%c0_26, %c0_27, %c0_28] : memref<1x32x128xf32, #tpu.memory_space<vmem>>, vector<1x32x128xf32>
    %49 = vector.shape_cast %48 : vector<1x32x128xf32> to vector<32x128xf32>
    %cst_29 = arith.constant dense<0.000000e+00> : vector<2x128xf32>
    %50 = tpu.matmul %41, %49, %cst_29 {dimension_numbers = #tpu.dot_dimension_numbers<[1], [0], [0], [1], [0, 0, 1, 1], [], []>} : vector<2x32xf32>, vector<32x128xf32>, vector<2x128xf32> -> vector<2x128xf32>
    %c1 = arith.constant 1 : index
    %c0_30 = arith.constant 0 : index
    %c0_31 = arith.constant 0 : index
    %51 = vector.load %arg14[%c1, %c0_30, %c0_31] : memref<2x2x32xf32, #tpu.memory_space<vmem>>, vector<1x2x32xf32>
    %52 = vector.shape_cast %51 : vector<1x2x32xf32> to vector<2x32xf32>
    %c1_32 = arith.constant 1 : index
    %c0_33 = arith.constant 0 : index
    %c0_34 = arith.constant 0 : index
    %53 = vector.load %arg4[%c1_32, %c0_33, %c0_34] : memref<2x32x128xf32, #tpu.memory_space<vmem>>, vector<1x32x128xf32>
    %54 = vector.shape_cast %53 : vector<1x32x128xf32> to vector<32x128xf32>
    %cst_35 = arith.constant dense<0.000000e+00> : vector<2x128xf32>
    %55 = tpu.matmul %52, %54, %cst_35 {dimension_numbers = #tpu.dot_dimension_numbers<[1], [0], [0], [1], [0, 0, 1, 1], [], []>} : vector<2x32xf32>, vector<32x128xf32>, vector<2x128xf32> -> vector<2x128xf32>
    %56 = arith.addf %50, %55 : vector<2x128xf32>
    %c0_36 = arith.constant 0 : index
    %c0_37 = arith.constant 0 : index
    %c0_38 = arith.constant 0 : index
    %57 = vector.load %arg6[%c0_36, %c0_37, %c0_38] : memref<1x1x128xf32, #tpu.memory_space<vmem>>, vector<1x1x128xf32>
    %58 = vector.shape_cast %57 : vector<1x1x128xf32> to vector<1x128xf32>
    %59 = vector.broadcast %58 : vector<1x128xf32> to vector<2x128xf32>
    %60 = arith.addf %56, %59 : vector<2x128xf32>
    %c1_39 = arith.constant 1 : index
    %c0_40 = arith.constant 0 : index
    %c0_41 = arith.constant 0 : index
    %61 = vector.load %arg15[%c1_39, %c0_40, %c0_41] : memref<2x2x32xf32, #tpu.memory_space<vmem>>, vector<1x2x32xf32>
    %62 = vector.shape_cast %61 : vector<1x2x32xf32> to vector<2x32xf32>
    %63 = vector.extract_strided_slice %60 {offsets = [0, 0], sizes = [2, 32], strides = [1, 1]} : vector<2x128xf32> to vector<2x32xf32>
    %64 = arith.negf %63 : vector<2x32xf32>
    %65 = math.exp %64 : vector<2x32xf32>
    %cst_42 = arith.constant 1.000000e+00 : f32
    %66 = vector.broadcast %cst_42 : f32 to vector<2x32xf32>
    %67 = arith.addf %66, %65 : vector<2x32xf32>
    %68 = arith.divf %66, %67 : vector<2x32xf32>
    %69 = vector.extract_strided_slice %60 {offsets = [0, 32], sizes = [2, 32], strides = [1, 1]} : vector<2x128xf32> to vector<2x32xf32>
    %70 = arith.negf %69 : vector<2x32xf32>
    %71 = math.exp %70 : vector<2x32xf32>
    %cst_43 = arith.constant 1.000000e+00 : f32
    %72 = vector.broadcast %cst_43 : f32 to vector<2x32xf32>
    %73 = arith.addf %72, %71 : vector<2x32xf32>
    %74 = arith.divf %72, %73 : vector<2x32xf32>
    %75 = vector.extract_strided_slice %60 {offsets = [0, 64], sizes = [2, 32], strides = [1, 1]} : vector<2x128xf32> to vector<2x32xf32>
    %76 = math.tanh %75 : vector<2x32xf32>
    %77 = vector.extract_strided_slice %60 {offsets = [0, 96], sizes = [2, 32], strides = [1, 1]} : vector<2x128xf32> to vector<2x32xf32>
    %78 = arith.negf %77 : vector<2x32xf32>
    %79 = math.exp %78 : vector<2x32xf32>
    %cst_44 = arith.constant 1.000000e+00 : f32
    %80 = vector.broadcast %cst_44 : f32 to vector<2x32xf32>
    %81 = arith.addf %80, %79 : vector<2x32xf32>
    %82 = arith.divf %80, %81 : vector<2x32xf32>
    %83 = arith.mulf %74, %62 : vector<2x32xf32>
    %84 = arith.mulf %68, %76 : vector<2x32xf32>
    %85 = arith.addf %83, %84 : vector<2x32xf32>
    %86 = math.tanh %85 : vector<2x32xf32>
    %87 = arith.mulf %82, %86 : vector<2x32xf32>
    %c1_45 = arith.constant 1 : index
    %c0_46 = arith.constant 0 : index
    %c0_47 = arith.constant 0 : index
    %88 = vector.load %arg14[%c1_45, %c0_46, %c0_47] : memref<2x2x32xf32, #tpu.memory_space<vmem>>, vector<1x2x32xf32>
    %89 = vector.shape_cast %88 : vector<1x2x32xf32> to vector<2x32xf32>
    %90 = vector.shape_cast %87 : vector<2x32xf32> to vector<1x2x32xf32>
    tpu.vector_store %arg14[%c1_45, %c0_46, %c0_47], %90 {strides = array<i32>} : memref<2x2x32xf32, #tpu.memory_space<vmem>>, vector<1x2x32xf32>,
    %c1_48 = arith.constant 1 : index
    %c0_49 = arith.constant 0 : index
    %c0_50 = arith.constant 0 : index
    %91 = vector.load %arg15[%c1_48, %c0_49, %c0_50] : memref<2x2x32xf32, #tpu.memory_space<vmem>>, vector<1x2x32xf32>
    %92 = vector.shape_cast %91 : vector<1x2x32xf32> to vector<2x32xf32>
    %93 = vector.shape_cast %85 : vector<2x32xf32> to vector<1x2x32xf32>
    tpu.vector_store %arg15[%c1_48, %c0_49, %c0_50], %93 {strides = array<i32>} : memref<2x2x32xf32, #tpu.memory_space<vmem>>, vector<1x2x32xf32>,
    %c0_51 = arith.constant 0 : index
    %c0_52 = arith.constant 0 : index
    %c0_53 = arith.constant 0 : index
    %94 = vector.load %arg2[%c0_51, %c0_52, %c0_53] : memref<2x8x32xf32, #tpu.memory_space<vmem>>, vector<2x8x32xf32>
    %c0_54 = arith.constant 0 : index
    %c0_55 = arith.constant 0 : index
    %95 = vector.load %arg9[%c0_54, %c0_55] : memref<32x32xf32, #tpu.memory_space<vmem>>, vector<32x32xf32>
    %cst_56 = arith.constant dense<0.000000e+00> : vector<2x32xf32>
    %96 = tpu.matmul %87, %95, %cst_56 {dimension_numbers = #tpu.dot_dimension_numbers<[1], [0], [0], [1], [0, 0, 1, 1], [], []>} : vector<2x32xf32>, vector<32x32xf32>, vector<2x32xf32> -> vector<2x32xf32>
    %97 = vector.shape_cast %96 : vector<2x32xf32> to vector<2x1x32xf32>
    "tpu.trace_start"() <{level = 10 : i32, message = "bth,bsh->bts"}> : () -> ()
    %cst_57 = arith.constant dense<0.000000e+00> : vector<2x1x8xf32>
    %98 = tpu.matmul %97, %94, %cst_57 {dimension_numbers = #tpu.dot_dimension_numbers<[2], [2], [1], [1], [0, 0, 0, 1, 1, 1], [0], [0]>} : vector<2x1x32xf32>, vector<2x8x32xf32>, vector<2x1x8xf32> -> vector<2x1x8xf32>
    "tpu.trace_stop"() : () -> ()
    %cst_58 = arith.constant dense<0xFF800000> : vector<2x1xf32>
    %99 = vector.multi_reduction <maximumf>, %98, %cst_58 [2] : vector<2x1x8xf32> to vector<2x1xf32>
    %100 = vector.shape_cast %99 : vector<2x1xf32> to vector<2x1x1xf32>
    %101 = vector.broadcast %100 : vector<2x1x1xf32> to vector<2x1x8xf32>
    %102 = arith.subf %98, %101 : vector<2x1x8xf32>
    %103 = math.exp %102 : vector<2x1x8xf32>
    %cst_59 = arith.constant dense<0.000000e+00> : vector<2x1xf32>
    %104 = vector.multi_reduction <add>, %103, %cst_59 [2] : vector<2x1x8xf32> to vector<2x1xf32>
    %105 = vector.shape_cast %104 : vector<2x1xf32> to vector<2x1x1xf32>
    %106 = tpu.reciprocal %105 {approx = true} : vector<2x1x1xf32> -> vector<2x1x1xf32>
    %107 = vector.broadcast %106 : vector<2x1x1xf32> to vector<2x1x8xf32>
    %108 = arith.mulf %103, %107 : vector<2x1x8xf32>
    "tpu.trace_start"() <{level = 10 : i32, message = "bts,bsh->bth"}> : () -> ()
    %cst_60 = arith.constant dense<0.000000e+00> : vector<2x1x32xf32>
    %109 = tpu.matmul %108, %94, %cst_60 {dimension_numbers = #tpu.dot_dimension_numbers<[2], [1], [1], [2], [0, 0, 0, 1, 1, 2], [0], [0]>} : vector<2x1x8xf32>, vector<2x8x32xf32>, vector<2x1x32xf32> -> vector<2x1x32xf32>
    "tpu.trace_stop"() : () -> ()
    %110 = vector.shape_cast %109 : vector<2x1x32xf32> to vector<2x32xf32>
    %c0_61 = arith.constant 0 : index
    %c0_62 = arith.constant 0 : index
    %111 = vector.load %arg10[%c0_61, %c0_62] : memref<32x32xf32, #tpu.memory_space<vmem>>, vector<32x32xf32>
    %cst_63 = arith.constant dense<0.000000e+00> : vector<2x32xf32>
    %112 = tpu.matmul %87, %111, %cst_63 {dimension_numbers = #tpu.dot_dimension_numbers<[1], [0], [0], [1], [0, 0, 1, 1], [], []>} : vector<2x32xf32>, vector<32x32xf32>, vector<2x32xf32> -> vector<2x32xf32>
    %c0_64 = arith.constant 0 : index
    %c0_65 = arith.constant 0 : index
    %113 = vector.load %arg11[%c0_64, %c0_65] : memref<32x32xf32, #tpu.memory_space<vmem>>, vector<32x32xf32>
    %cst_66 = arith.constant dense<0.000000e+00> : vector<2x32xf32>
    %114 = tpu.matmul %110, %113, %cst_66 {dimension_numbers = #tpu.dot_dimension_numbers<[1], [0], [0], [1], [0, 0, 1, 1], [], []>} : vector<2x32xf32>, vector<32x32xf32>, vector<2x32xf32> -> vector<2x32xf32>
    %115 = arith.addf %112, %114 : vector<2x32xf32>
    %c0_67 = arith.constant 0 : index
    %c0_68 = arith.constant 0 : index
    %116 = vector.load %arg12[%c0_67, %c0_68] : memref<1x32xf32, #tpu.memory_space<vmem>>, vector<1x32xf32>
    %117 = vector.broadcast %116 : vector<1x32xf32> to vector<2x32xf32>
    %118 = arith.addf %115, %117 : vector<2x32xf32>
    %119 = math.tanh %118 : vector<2x32xf32>
    %c0_69 = arith.constant 0 : index
    %c0_70 = arith.constant 0 : index
    %120 = vector.load %arg16[%c0_69, %c0_70] : memref<2x32xf32, #tpu.memory_space<vmem>>, vector<2x32xf32>
    tpu.vector_store %arg16[%c0_69, %c0_70], %119 {strides = array<i32>} : memref<2x32xf32, #tpu.memory_space<vmem>>, vector<2x32xf32>,
    %c0_71 = arith.constant 0 : index
    %c0_72 = arith.constant 0 : index
    %c0_73 = arith.constant 0 : index
    %121 = vector.load %arg13[%c0_71, %c0_72, %c0_73] : memref<1x2x32xf32, #tpu.memory_space<vmem>>, vector<1x2x32xf32>
    %122 = vector.shape_cast %121 : vector<1x2x32xf32> to vector<2x32xf32>
    %123 = vector.shape_cast %119 : vector<2x32xf32> to vector<1x2x32xf32>
    tpu.vector_store %arg13[%c0_71, %c0_72, %c0_73], %123 {strides = array<i32>} : memref<1x2x32xf32, #tpu.memory_space<vmem>>, vector<1x2x32xf32>,
    return
  }
  func.func @transform_0(%arg0: i32) -> (i32, i32, i32) {
    %c0_i32 = arith.constant 0 : i32
    %c0_i32_0 = arith.constant 0 : i32
    %c0_i32_1 = arith.constant 0 : i32
    return %arg0, %c0_i32, %c0_i32_0 : i32, i32, i32
  }
  func.func @transform_1(%arg0: i32) -> (i32, i32, i32) {
    %c0_i32 = arith.constant 0 : i32
    %c0_i32_0 = arith.constant 0 : i32
    %c0_i32_1 = arith.constant 0 : i32
    %c0_i32_2 = arith.constant 0 : i32
    return %c0_i32, %c0_i32_0, %c0_i32_1 : i32, i32, i32
  }
  func.func @transform_2(%arg0: i32) -> (i32, i32) {
    %c0_i32 = arith.constant 0 : i32
    %c0_i32_0 = arith.constant 0 : i32
    %c0_i32_1 = arith.constant 0 : i32
    return %c0_i32, %c0_i32_0 : i32, i32
  }
  func.func @transform_3(%arg0: i32) -> (i32, i32, i32) {
    %c0_i32 = arith.constant 0 : i32
    %c0_i32_0 = arith.constant 0 : i32
    %c0_i32_1 = arith.constant 0 : i32
    %c0_i32_2 = arith.constant 0 : i32
    return %c0_i32, %c0_i32_0, %c0_i32_1 : i32, i32, i32
  }
  func.func @transform_4(%arg0: i32) -> (i32, i32, i32) {
    %c0_i32 = arith.constant 0 : i32
    %c0_i32_0 = arith.constant 0 : i32
    %c0_i32_1 = arith.constant 0 : i32
    %c0_i32_2 = arith.constant 0 : i32
    return %c0_i32, %c0_i32_0, %c0_i32_1 : i32, i32, i32
  }
  func.func @transform_5(%arg0: i32) -> (i32, i32, i32) {
    %c0_i32 = arith.constant 0 : i32
    %c0_i32_0 = arith.constant 0 : i32
    %c0_i32_1 = arith.constant 0 : i32
    %c0_i32_2 = arith.constant 0 : i32
    return %c0_i32, %c0_i32_0, %c0_i32_1 : i32, i32, i32
  }
  func.func @transform_6(%arg0: i32) -> (i32, i32, i32) {
    %c0_i32 = arith.constant 0 : i32
    %c0_i32_0 = arith.constant 0 : i32
    %c0_i32_1 = arith.constant 0 : i32
    %c0_i32_2 = arith.constant 0 : i32
    return %c0_i32, %c0_i32_0, %c0_i32_1 : i32, i32, i32
  }
  func.func @transform_7(%arg0: i32) -> (i32, i32, i32) {
    %c0_i32 = arith.constant 0 : i32
    %c0_i32_0 = arith.constant 0 : i32
    %c0_i32_1 = arith.constant 0 : i32
    %c0_i32_2 = arith.constant 0 : i32
    return %c0_i32, %c0_i32_0, %c0_i32_1 : i32, i32, i32
  }
  func.func @transform_8(%arg0: i32) -> (i32, i32) {
    %c0_i32 = arith.constant 0 : i32
    %c0_i32_0 = arith.constant 0 : i32
    %c0_i32_1 = arith.constant 0 : i32
    return %c0_i32, %c0_i32_0 : i32, i32
  }
  func.func @transform_9(%arg0: i32) -> (i32, i32) {
    %c0_i32 = arith.constant 0 : i32
    %c0_i32_0 = arith.constant 0 : i32
    %c0_i32_1 = arith.constant 0 : i32
    return %c0_i32, %c0_i32_0 : i32, i32
  }
  func.func @transform_10(%arg0: i32) -> (i32, i32) {
    %c0_i32 = arith.constant 0 : i32
    %c0_i32_0 = arith.constant 0 : i32
    %c0_i32_1 = arith.constant 0 : i32
    return %c0_i32, %c0_i32_0 : i32, i32
  }
  func.func @transform_11(%arg0: i32) -> (i32, i32) {
    %c0_i32 = arith.constant 0 : i32
    %c0_i32_0 = arith.constant 0 : i32
    %c0_i32_1 = arith.constant 0 : i32
    return %c0_i32, %c0_i32_0 : i32, i32
  }
  func.func @transform_12(%arg0: i32) -> (i32, i32, i32) {
    %c0_i32 = arith.constant 0 : i32
    %c0_i32_0 = arith.constant 0 : i32
    %c0_i32_1 = arith.constant 0 : i32
    return %arg0, %c0_i32, %c0_i32_0 : i32, i32, i32
  }
}

module attributes {stable_mosaic.version = 11 : i64} {
  func.func @_generator_kernel(%arg0: memref<12x32xf32, #tpu.memory_space<vmem>>, %arg1: memref<32x19xf32, #tpu.memory_space<vmem>>, %arg2: memref<1x19xf32, #tpu.memory_space<vmem>>, %arg3: memref<12x19xf32, #tpu.memory_space<vmem>>) attributes {dimension_semantics = [], scalar_prefetch = 0 : i64, scratch_operands = 0 : i64, tpu.core_type = #tpu.core_type<tc>} {
    %c0 = arith.constant 0 : index
    %c0_0 = arith.constant 0 : index
    %0 = vector.load %arg0[%c0, %c0_0] : memref<12x32xf32, #tpu.memory_space<vmem>>, vector<12x32xf32>
    %c0_1 = arith.constant 0 : index
    %c0_2 = arith.constant 0 : index
    %1 = vector.load %arg1[%c0_1, %c0_2] : memref<32x19xf32, #tpu.memory_space<vmem>>, vector<32x19xf32>
    %cst = arith.constant dense<0.000000e+00> : vector<12x19xf32>
    %2 = tpu.matmul %0, %1, %cst {dimension_numbers = #tpu.dot_dimension_numbers<[1], [0], [0], [1], [0, 0, 1, 1], [], []>} : vector<12x32xf32>, vector<32x19xf32>, vector<12x19xf32> -> vector<12x19xf32>
    %c0_3 = arith.constant 0 : index
    %c0_4 = arith.constant 0 : index
    %3 = vector.load %arg2[%c0_3, %c0_4] : memref<1x19xf32, #tpu.memory_space<vmem>>, vector<1x19xf32>
    %4 = vector.broadcast %3 : vector<1x19xf32> to vector<12x19xf32>
    %5 = arith.addf %2, %4 : vector<12x19xf32>
    %cst_5 = arith.constant dense<0xFF800000> : vector<12xf32>
    %6 = vector.multi_reduction <maximumf>, %5, %cst_5 [1] : vector<12x19xf32> to vector<12xf32>
    %7 = vector.shape_cast %6 : vector<12xf32> to vector<12x1xf32>
    %8 = vector.broadcast %7 : vector<12x1xf32> to vector<12x19xf32>
    %9 = arith.subf %5, %8 : vector<12x19xf32>
    %10 = math.exp %9 : vector<12x19xf32>
    %cst_6 = arith.constant dense<0.000000e+00> : vector<12xf32>
    %11 = vector.multi_reduction <add>, %10, %cst_6 [1] : vector<12x19xf32> to vector<12xf32>
    %12 = vector.shape_cast %11 : vector<12xf32> to vector<12x1xf32>
    %13 = math.log %12 : vector<12x1xf32>
    %14 = arith.addf %13, %7 : vector<12x1xf32>
    %15 = vector.broadcast %14 : vector<12x1xf32> to vector<12x19xf32>
    %16 = arith.subf %5, %15 : vector<12x19xf32>
    %c0_7 = arith.constant 0 : index
    %c0_8 = arith.constant 0 : index
    %17 = vector.load %arg3[%c0_7, %c0_8] : memref<12x19xf32, #tpu.memory_space<vmem>>, vector<12x19xf32>
    tpu.vector_store %arg3[%c0_7, %c0_8], %16 {strides = array<i32>} : memref<12x19xf32, #tpu.memory_space<vmem>>, vector<12x19xf32>,
    return
  }
}

</mosaic_0001>

<llo_original>
// kernel: seq2seq_forward.4
$region0: #{seq2seq_forward.4}
  #allocation0 [shape = 'u32[]', space=smem, size = 0x4, offset = 0x4, fixed_abs, tag = 'smem constant byte address 0x4 - core index']
  #allocation1 [shape = 'u32[72,128]{1,0:T(1,128)}', space=vmem, size = 0x9000, scoped, tag = 'internal scratch']
  #allocation2 [shape = 'f32[2,16]{1,0:T(2,128)}', space=vmem, size = 0x400, scoped, tag = 'scratch operand']
  #allocation3 [shape = 'f32[2,16]{1,0:T(2,128)}', space=vmem, size = 0x400, scoped, tag = 'scratch operand']
  #allocation4 [shape = 'f32[2,16]{1,0:T(2,128)}', space=vmem, size = 0x400, scoped, tag = 'scratch operand']
  #allocation5 [shape = 'f32[2,16]{1,0:T(2,128)}', space=vmem, size = 0x400, scoped, tag = 'scratch operand']
  %s0 = inlined_call_operand.vmem [shape: f32[8,2,64], index: 0, kind: input, shape index: {}]
  %s1 = inlined_call_operand.vmem [shape: f32[8,2,64], index: 1, kind: input, shape index: {}]
  %s2 = inlined_call_operand.vmem [shape: f32[16,64], index: 2, kind: input, shape index: {}]
  %s3 = inlined_call_operand.vmem [shape: f32[16,64], index: 3, kind: input, shape index: {}]
  %s4 = inlined_call_operand.vmem [shape: f32[8,2,16], index: 4, kind: output, shape index: {0}]
  %s5 = inlined_call_operand.vmem [shape: f32[8,2,16], index: 5, kind: output, shape index: {1}]
  %s6 = inlined_call_operand.vmem [shape: f32[2,16], index: 6, kind: output, shape index: {2}]
  %s7 = inlined_call_operand.vmem [shape: f32[2,16], index: 7, kind: output, shape index: {3}]
  %s8 = inlined_call_operand.vmem [shape: f32[2,16], index: 8, kind: output, shape index: {4}]
  %s9 = inlined_call_operand.vmem [shape: f32[2,16], index: 9, kind: output, shape index: {5}]
  %10 = xla_tuple %s4, %s5, %s6, %s7, %s8, %s9
  %s11 = sld [smem:[#allocation0]]
  $region93: #{seq2seq_forward.4} parent=0
    _
  %s13 = ssub.s32 1, %s11
  %s14 = scalar_select 0, %s13, %s11
  loop: start=0, step=1, limit=10
  $region2: #{seq2seq_forward.4} parent=0 // loop_pre_header
    _
  $region3: #{seq2seq_forward.4} parent=0 // loop_header
    %s16 = sphi 0, %s20
    %p17 = scmp.ge.s32.totalorder %s16, 10
    %s26 = sphi 0, %s28
    %s29 = sphi 0, %s26
    %s30 = sphi 0, %s29
    %s46 = sphi 0, %s30
    %s54 = sphi 0, %s56
    %s57 = sphi 0, %s54
    %s58 = sphi 0, %s57
    %s74 = sphi 0, %s58
    %s78 = sphi 0, %s78
    %s80 = sphi 0, %s78
    %s81 = sphi 0, %s80
    %s95 = sphi 0, %s81
    %s99 = sphi 0, %s99
    %s101 = sphi 0, %s99
    %s102 = sphi 0, %s101
    %s116 = sphi 0, %s102
    %s122 = sphi 0, %s124
    %s125 = sphi 0, %s122
    %s126 = sphi 0, %s125
    %s142 = sphi 0, %s126
    %s150 = sphi 0, %s152
    %s153 = sphi 0, %s150
    %s154 = sphi 0, %s153
    %s170 = sphi 0, %s154
    %s174 = sphi 0, %s174
    %s176 = sphi 0, %s174
    %s177 = sphi 0, %s176
    %s191 = sphi 0, %s177
    %s195 = sphi 0, %s195
    %s197 = sphi 0, %s195
    %s198 = sphi 0, %s197
    %s212 = sphi 0, %s198
    %s216 = sphi 0, %s216
    %s218 = sphi 0, %s216
    %s219 = sphi 0, %s218
    %s233 = sphi 0, %s219
    %s237 = sphi 0, %s237
    %s239 = sphi 0, %s237
    %s240 = sphi 0, %s239
    %s254 = sphi 0, %s240
  $region4: #{seq2seq_forward.4} parent=0 // loop_header_branch
    %19 = sbr.rel (%p17) target = $region8
  $region5: #{seq2seq_forward.4} parent=0 // loop_body
    %s21 = ssub.s32 %s16, 1
    %s22 = ssub.s32 %s16, 2
    %s23 = sadd.s32 %s16, 1
    %s24 = ssub.s32 %s16, %s23
    %p25 = scmp.eq.s32.totalorder %s24, 0
    %s27 = sadd.s32 %s26, 1
    %s28 = scalar_select %p25, %s26, %s27
    %p31 = pneg %p25
    %p32 = scmp.eq.s32.totalorder %s16, 7
    %p33 = por %p31, %p32
    %p34 = scmp.ne.s32.totalorder %s26, %s29
    %p35 = scmp.eq.s32.totalorder %s16, 0
    %p36 = por %p34, %p35
    %p37 = scmp.ne.s32.totalorder %s26, %s29
    %p38 = scmp.eq.s32.totalorder %s21, 7
    %p39 = por %p37, %p38
    %p40 = scmp.ne.s32.totalorder %s29, %s30
    %p41 = scmp.eq.s32.totalorder %s21, 0
    %p42 = por %p40, %p41
    %p43 = scmp.ne.s32.totalorder %s29, %s30
    %p44 = scmp.eq.s32.totalorder %s22, 7
    %p45 = por %p43, %p44
    %p47 = scmp.ne.s32.totalorder %s30, %s46
    %p48 = scmp.eq.s32.totalorder %s22, 0
    %p49 = por %p47, %p48
    %s50 = ssub.s32 7, %s16
    %s51 = ssub.s32 7, %s23
    %s52 = ssub.s32 %s50, %s51
    %p53 = scmp.eq.s32.totalorder %s52, 0
    %s55 = sadd.s32 %s54, 1
    %s56 = scalar_select %p53, %s54, %s55
    %p59 = pneg %p53
    %p60 = scmp.eq.s32.totalorder %s16, 7
    %p61 = por %p59, %p60
    %p62 = scmp.ne.s32.totalorder %s54, %s57
    %p63 = scmp.eq.s32.totalorder %s16, 0
    %p64 = por %p62, %p63
    %p65 = scmp.ne.s32.totalorder %s54, %s57
    %p66 = scmp.eq.s32.totalorder %s21, 7
    %p67 = por %p65, %p66
    %p68 = scmp.ne.s32.totalorder %s57, %s58
    %p69 = scmp.eq.s32.totalorder %s21, 0
    %p70 = por %p68, %p69
    %p71 = scmp.ne.s32.totalorder %s57, %s58
    %p72 = scmp.eq.s32.totalorder %s22, 7
    %p73 = por %p71, %p72
    %p75 = scmp.ne.s32.totalorder %s58, %s74
    %p76 = scmp.eq.s32.totalorder %s22, 0
    %p77 = por %p75, %p76
    %s79 = sadd.s32 %s78, 1
    %p82 = scmp.eq.s32.totalorder %s16, 7
    %p83 = scmp.ne.s32.totalorder %s78, %s80
    %p84 = scmp.eq.s32.totalorder %s16, 0
    %p85 = por %p83, %p84
    %p86 = scmp.ne.s32.totalorder %s78, %s80
    %p87 = scmp.eq.s32.totalorder %s21, 7
    %p88 = por %p86, %p87
    %p89 = scmp.ne.s32.totalorder %s80, %s81
    %p90 = scmp.eq.s32.totalorder %s21, 0
    %p91 = por %p89, %p90
    %p92 = scmp.ne.s32.totalorder %s80, %s81
    %p93 = scmp.eq.s32.totalorder %s22, 7
    %p94 = por %p92, %p93
    %p96 = scmp.ne.s32.totalorder %s81, %s95
    %p97 = scmp.eq.s32.totalorder %s22, 0
    %p98 = por %p96, %p97
    %s100 = sadd.s32 %s99, 1
    %p103 = scmp.eq.s32.totalorder %s16, 7
    %p104 = scmp.ne.s32.totalorder %s99, %s101
    %p105 = scmp.eq.s32.totalorder %s16, 0
    %p106 = por %p104, %p105
    %p107 = scmp.ne.s32.totalorder %s99, %s101
    %p108 = scmp.eq.s32.totalorder %s21, 7
    %p109 = por %p107, %p108
    %p110 = scmp.ne.s32.totalorder %s101, %s102
    %p111 = scmp.eq.s32.totalorder %s21, 0
    %p112 = por %p110, %p111
    %p113 = scmp.ne.s32.totalorder %s101, %s102
    %p114 = scmp.eq.s32.totalorder %s22, 7
    %p115 = por %p113, %p114
    %p117 = scmp.ne.s32.totalorder %s102, %s116
    %p118 = scmp.eq.s32.totalorder %s22, 0
    %p119 = por %p117, %p118
    %s120 = ssub.s32 %s16, %s23
    %p121 = scmp.eq.s32.totalorder %s120, 0
    %s123 = sadd.s32 %s122, 1
    %s124 = scalar_select %p121, %s122, %s123
    %p127 = pneg %p121
    %p128 = scmp.eq.s32.totalorder %s16, 7
    %p129 = por %p127, %p128
    %p130 = scmp.ne.s32.totalorder %s122, %s125
    %p131 = scmp.eq.s32.totalorder %s16, 0
    %p132 = por %p130, %p131
    %p133 = scmp.ne.s32.totalorder %s122, %s125
    %p134 = scmp.eq.s32.totalorder %s21, 7
    %p135 = por %p133, %p134
    %p136 = scmp.ne.s32.totalorder %s125, %s126
    %p137 = scmp.eq.s32.totalorder %s21, 0
    %p138 = por %p136, %p137
    %p139 = scmp.ne.s32.totalorder %s125, %s126
    %p140 = scmp.eq.s32.totalorder %s22, 7
    %p141 = por %p139, %p140
    %p143 = scmp.ne.s32.totalorder %s126, %s142
    %p144 = scmp.eq.s32.totalorder %s22, 0
    %p145 = por %p143, %p144
    %s146 = ssub.s32 7, %s16
    %s147 = ssub.s32 7, %s23
    %s148 = ssub.s32 %s146, %s147
    %p149 = scmp.eq.s32.totalorder %s148, 0
    %s151 = sadd.s32 %s150, 1
    %s152 = scalar_select %p149, %s150, %s151
    %p155 = pneg %p149
    %p156 = scmp.eq.s32.totalorder %s16, 7
    %p157 = por %p155, %p156
    %p158 = scmp.ne.s32.totalorder %s150, %s153
    %p159 = scmp.eq.s32.totalorder %s16, 0
    %p160 = por %p158, %p159
    %p161 = scmp.ne.s32.totalorder %s150, %s153
    %p162 = scmp.eq.s32.totalorder %s21, 7
    %p163 = por %p161, %p162
    %p164 = scmp.ne.s32.totalorder %s153, %s154
    %p165 = scmp.eq.s32.totalorder %s21, 0
    %p166 = por %p164, %p165
    %p167 = scmp.ne.s32.totalorder %s153, %s154
    %p168 = scmp.eq.s32.totalorder %s22, 7
    %p169 = por %p167, %p168
    %p171 = scmp.ne.s32.totalorder %s154, %s170
    %p172 = scmp.eq.s32.totalorder %s22, 0
    %p173 = por %p171, %p172
    %s175 = sadd.s32 %s174, 1
    %p178 = scmp.eq.s32.totalorder %s16, 7
    %p179 = scmp.ne.s32.totalorder %s174, %s176
    %p180 = scmp.eq.s32.totalorder %s16, 0
    %p181 = por %p179, %p180
    %p182 = scmp.ne.s32.totalorder %s174, %s176
    %p183 = scmp.eq.s32.totalorder %s21, 7
    %p184 = por %p182, %p183
    %p185 = scmp.ne.s32.totalorder %s176, %s177
    %p186 = scmp.eq.s32.totalorder %s21, 0
    %p187 = por %p185, %p186
    %p188 = scmp.ne.s32.totalorder %s176, %s177
    %p189 = scmp.eq.s32.totalorder %s22, 7
    %p190 = por %p188, %p189
    %p192 = scmp.ne.s32.totalorder %s177, %s191
    %p193 = scmp.eq.s32.totalorder %s22, 0
    %p194 = por %p192, %p193
    %s196 = sadd.s32 %s195, 1
    %p199 = scmp.eq.s32.totalorder %s16, 7
    %p200 = scmp.ne.s32.totalorder %s195, %s197
    %p201 = scmp.eq.s32.totalorder %s16, 0
    %p202 = por %p200, %p201
    %p203 = scmp.ne.s32.totalorder %s195, %s197
    %p204 = scmp.eq.s32.totalorder %s21, 7
    %p205 = por %p203, %p204
    %p206 = scmp.ne.s32.totalorder %s197, %s198
    %p207 = scmp.eq.s32.totalorder %s21, 0
    %p208 = por %p206, %p207
    %p209 = scmp.ne.s32.totalorder %s197, %s198
    %p210 = scmp.eq.s32.totalorder %s22, 7
    %p211 = por %p209, %p210
    %p213 = scmp.ne.s32.totalorder %s198, %s212
    %p214 = scmp.eq.s32.totalorder %s22, 0
    %p215 = por %p213, %p214
    %s217 = sadd.s32 %s216, 1
    %p220 = scmp.eq.s32.totalorder %s16, 7
    %p221 = scmp.ne.s32.totalorder %s216, %s218
    %p222 = scmp.eq.s32.totalorder %s16, 0
    %p223 = por %p221, %p222
    %p224 = scmp.ne.s32.totalorder %s216, %s218
    %p225 = scmp.eq.s32.totalorder %s21, 7
    %p226 = por %p224, %p225
    %p227 = scmp.ne.s32.totalorder %s218, %s219
    %p228 = scmp.eq.s32.totalorder %s21, 0
    %p229 = por %p227, %p228
    %p230 = scmp.ne.s32.totalorder %s218, %s219
    %p231 = scmp.eq.s32.totalorder %s22, 7
    %p232 = por %p230, %p231
    %p234 = scmp.ne.s32.totalorder %s219, %s233
    %p235 = scmp.eq.s32.totalorder %s22, 0
    %p236 = por %p234, %p235
    %s238 = sadd.s32 %s237, 1
    %p241 = scmp.eq.s32.totalorder %s16, 7
    %p242 = scmp.ne.s32.totalorder %s237, %s239
    %p243 = scmp.eq.s32.totalorder %s16, 0
    %p244 = por %p242, %p243
    %p245 = scmp.ne.s32.totalorder %s237, %s239
    %p246 = scmp.eq.s32.totalorder %s21, 7
    %p247 = por %p245, %p246
    %p248 = scmp.ne.s32.totalorder %s239, %s240
    %p249 = scmp.eq.s32.totalorder %s21, 0
    %p250 = por %p248, %p249
    %p251 = scmp.ne.s32.totalorder %s239, %s240
    %p252 = scmp.eq.s32.totalorder %s22, 7
    %p253 = por %p251, %p252
    %p255 = scmp.ne.s32.totalorder %s240, %s254
    %p256 = scmp.eq.s32.totalorder %s22, 0
    %p257 = por %p255, %p256
    %p258 = scmp.le.s32.totalorder 1, %s16
    %p259 = scmp.lt.s32.totalorder %s16, 9
    %p260 = pnand %p258, %p259
    %p261 = pneg %p260
    // Predicated region
    $region9: #{seq2seq_forward.4} parent=5 // pred_check
      _
    $region10: #{seq2seq_forward.4} parent=5 // pred_check_branch
      %263 = sbr.rel (%p260) target = $region12
    $region11: #{seq2seq_forward.4} parent=5 // pred_region
      %s264 = ssub.s32 %s16, 1
      // Predicated region
      $region13: #{seq2seq_forward.4} parent=11 // pred_check
        %p265 = pneg %p91
      $region14: #{seq2seq_forward.4} parent=11 // pred_check_branch
        %267 = sbr.rel (%p265) target = $region16
      $region15: #{seq2seq_forward.4} parent=11 // pred_region
        _
      $region16: #{seq2seq_forward.4} parent=11 // pred_fallthru
        _
      // Predicated region
      $region17: #{seq2seq_forward.4} parent=11 // pred_check
        %p268 = pneg %p112
      $region18: #{seq2seq_forward.4} parent=11 // pred_check_branch
        %270 = sbr.rel (%p268) target = $region20
      $region19: #{seq2seq_forward.4} parent=11 // pred_region
        _
      $region20: #{seq2seq_forward.4} parent=11 // pred_fallthru
        _
    $region12: #{seq2seq_forward.4} parent=5 // pred_fallthru
      _
    %p271 = scmp.lt.s32.totalorder %s16, 8
    // Predicated region
    $region21: #{seq2seq_forward.4} parent=5 // pred_check
      %p272 = pneg %p271
    $region22: #{seq2seq_forward.4} parent=5 // pred_check_branch
      %274 = sbr.rel (%p272) target = $region24
    $region23: #{seq2seq_forward.4} parent=5 // pred_region
      // Predicated region
      $region25: #{seq2seq_forward.4} parent=23 // pred_check
        %p275 = pneg %p36
      $region26: #{seq2seq_forward.4} parent=23 // pred_check_branch
        %277 = sbr.rel (%p275) target = $region28
      $region27: #{seq2seq_forward.4} parent=23 // pred_region
        %p278 = scmp.lt.s32.totalorder %s16, 7
        %s279 = scalar_select %p278, %s16, 7
        %s280 = smul.addr %s279, 2
        %s281 = scalar_lea.vmem %s0, %s280
      $region28: #{seq2seq_forward.4} parent=23 // pred_fallthru
        _
      // Predicated region
      $region29: #{seq2seq_forward.4} parent=23 // pred_check
        %p282 = pneg %p64
      $region30: #{seq2seq_forward.4} parent=23 // pred_check_branch
        %284 = sbr.rel (%p282) target = $region32
      $region31: #{seq2seq_forward.4} parent=23 // pred_region
        %s285 = ssub.s32 7, %s16
        %p286 = scmp.lt.s32.totalorder %s285, 7
        %s287 = scalar_select %p286, %s285, 7
        %s288 = smul.addr %s287, 2
        %s289 = scalar_lea.vmem %s1, %s288
        %s290 = ssub.s32 7, %s16
      $region32: #{seq2seq_forward.4} parent=23 // pred_fallthru
        _
    $region24: #{seq2seq_forward.4} parent=5 // pred_fallthru
      _
    %p291 = scmp.le.s32.totalorder 1, %s16
    %p292 = scmp.lt.s32.totalorder %s16, 9
    %p293 = pnand %p291, %p292
    %p294 = pneg %p293
    // Predicated region
    $region33: #{seq2seq_forward.4} parent=5 // pred_check
      _
    $region34: #{seq2seq_forward.4} parent=5 // pred_check_branch
      %296 = sbr.rel (%p293) target = $region36
    $region35: #{seq2seq_forward.4} parent=5 // pred_region
      %s297 = ssub.s32 %s16, 1
      %p298 = scmp.lt.s32.totalorder %s21, 7
      %s299 = scalar_select %p298, %s21, 7
      %s300 = smul.addr %s299, 2
      %s301 = scalar_lea.vmem %s0, %s300
      %p302 = pneg %p42
      %p303 = pneg %p39
      %s304 = ssub.s32 7, %s21
      %p305 = scmp.lt.s32.totalorder %s304, 7
      %s306 = scalar_select %p305, %s304, 7
      %s307 = smul.addr %s306, 2
      %s308 = scalar_lea.vmem %s1, %s307
      %p309 = pneg %p70
      %p310 = pneg %p67
      %p311 = pneg %p91
      %p312 = pneg %p88
      %p313 = pneg %p112
      %p314 = pneg %p109
      %p315 = pneg %p138
      %p316 = pneg %p135
      %p317 = scmp.lt.s32.totalorder %s21, 7
      %s318 = scalar_select %p317, %s21, 7
      %s319 = smul.addr %s318, 2
      %s320 = scalar_lea.vmem %s4, %s319
      %p321 = pneg %p166
      %p322 = pneg %p163
      %s323 = ssub.s32 7, %s21
      %p324 = scmp.lt.s32.totalorder %s323, 7
      %s325 = scalar_select %p324, %s323, 7
      %s326 = smul.addr %s325, 2
      %s327 = scalar_lea.vmem %s5, %s326
      %p328 = pneg %p187
      %p329 = pneg %p184
      %p330 = pneg %p208
      %p331 = pneg %p205
      %p332 = pneg %p229
      %p333 = pneg %p226
      %p334 = pneg %p250
      %p335 = pneg %p247
      %p336 = scmp.lt.s32.totalorder %s21, 7
      %s337 = scalar_select %p336, %s21, 7
      %s338 = smul.addr %s337, 2
      %s339 = scalar_lea.vmem %s0, %s338
      %s340 = ssub.s32 7, %s21
      %p341 = scmp.lt.s32.totalorder %s340, 7
      %s342 = scalar_select %p341, %s340, 7
      %s343 = smul.addr %s342, 2
      %s344 = scalar_lea.vmem %s1, %s343
      %s345 = ssub.s32 7, %s21
      %p346 = scmp.lt.s32.totalorder %s21, 7
      %s347 = scalar_select %p346, %s21, 7
      %s348 = smul.addr %s347, 2
      %s349 = scalar_lea.vmem %s4, %s348
      %s350 = ssub.s32 7, %s21
      %p351 = scmp.lt.s32.totalorder %s350, 7
      %s352 = scalar_select %p351, %s350, 7
      %s353 = smul.addr %s352, 2
      %s354 = scalar_lea.vmem %s5, %s353
      %s355 = ssub.s32 7, %s21
      %p356 = scmp.eq.s32.totalorder %s21, 0
      // Predicated region
      $region37: #{seq2seq_forward.4} parent=35 // pred_check
        %p357 = pneg %p356
      $region38: #{seq2seq_forward.4} parent=35 // pred_check_branch
        %359 = sbr.rel (%p357) target = $region40
      $region39: #{seq2seq_forward.4} parent=35 // pred_region
        %vm360 = vcmask 123904
        %361 = vst.msk [vmem:[#allocation2] sm:$0x3] %vm360, 0.0
        %362 = vst.msk [vmem:[#allocation3] sm:$0x3] %vm360, 0.0
        %363 = vst.msk [vmem:[#allocation4] sm:$0x3] %vm360, 0.0
        %364 = vst.msk [vmem:[#allocation5] sm:$0x3] %vm360, 0.0
      $region40: #{seq2seq_forward.4} parent=35 // pred_fallthru
        _
      %v365 = vld [vmem:[%s339] sm:$0x3]
      %v366 = vld [vmem:[#allocation2] sm:$0x3]
      %v367 = vld [vmem:[%s2] sm:$0xff]
      %v368 = vld [vmem:[%s2 + $0x8] sm:$0xff]
      %vm369 = vcmask 130048
      %v371 = vsel %vm369, %v366, 0
      %373 = vmatpush.msra.mxu0 0.0
      %374 = vmatpush.msra.mxu0 0.0
      %375 = vmatpush.msra.mxu0 0.0
      %376 = vmatpush.msra.mxu0 0.0
      %377 = vmatpush.msra.mxu0 0.0
      %378 = vmatpush.msra.mxu0 0.0
      %379 = vmatpush.msra.mxu0 0.0
      %380 = vmatpush.msra.mxu0 0.0
      %381 = vmatpush.msra.mxu0 0.0
      %382 = vmatpush.msra.mxu0 0.0
      %383 = vmatpush.msra.mxu0 0.0
      %384 = vmatpush.msra.mxu0 0.0
      %385 = vmatpush.msra.mxu0 0.0
      %386 = vmatpush.msra.mxu0 0.0
      %387 = vmatpush.msra.mxu0 %v368
      %388 = vmatpush.msra.mxu0 %v367
      %389 = vmatmul.f32.gmra.mxu0 %v371
      %v390 = vpop.f32.mrf.mxu0
      %v391 = vadd.f32 0.0, %v390
      %392 = vdwg.mxu0
      %v393 = vadd.f32 %v365, %v391
      %v394 = vld [vmem:[#allocation3] sm:$0x3]
      %v395 = vxor.u32 %v393, 2147483648
      %v396 = vmul.f32 %v395, 1.442695
      %v397 = vpow.pop %v396
      %v398 = vadd.f32 %v397, 1.0
      %v399 = vrcp.pop %v398
      %v400 = vmul.f32 %v398, %v399
      %v401 = vsub.f32 1.0, %v400
      %v402 = vmul.f32 %v399, %v401
      %v403 = vadd.f32 %v399, %v402
      %vm404 = vweird.f32 %v398
      %vm405 = vweird.f32 %v399
      %vm406 = vmor %vm404, %vm405
      %v407 = vsel %vm406, %v399, %v403
      %v408 = vand.u32 2147483647, %v398
      %vm409 = vcmp.eq.f32.partialorder %v408, 8.507059e+37
      %v410 = vand.u32 %v398, 2147483648
      %v411 = vor.u32 1.1754944e-38, %v410
      %v412 = vsel %vm409, %v411, %v407
      %v413 = vmul.f32 1.0, %v412
      %v414 = vtanh.pop %v393
      %416 = vrot.lane.b32.xlu0 %v394, 16
      %v417 = vpop.permute.xlu0 %416
      %v419 = vmul.f32 %v413, %v417
      %421 = vrot.lane.b32.xlu0 %v414, 96
      %v422 = vpop.permute.xlu0 %421
      %v424 = vmul.f32 %v413, %v422
      %426 = vrot.lane.b32.xlu0 %v424, 16
      %v427 = vpop.permute.xlu0 %426
      %v429 = vadd.f32 %v419, %v427
      %v430 = vtanh.pop %v429
      %432 = vrot.lane.b32.xlu0 %v430, 32
      %v433 = vpop.permute.xlu0 %432
      %v435 = vmul.f32 %v413, %v433
      %437 = vrot.lane.b32.xlu0 %v435, 80
      %v438 = vpop.permute.xlu0 %437
      %vm440 = vcmask 123904
      %441 = vst.msk [vmem:[#allocation2] sm:$0x3] %vm440, %v438
      %443 = vrot.lane.b32.xlu0 %v429, 112
      %v444 = vpop.permute.xlu0 %443
      %446 = vst.msk [vmem:[#allocation3] sm:$0x3] %vm440, %v444
      %447 = vst.msk [vmem:[%s349] sm:$0x3] %vm440, %v438
      %448 = vst.msk [vmem:[%s6] sm:$0x3] %vm440, %v438
      %449 = vst.msk [vmem:[%s7] sm:$0x3] %vm440, %v444
      %v450 = vld [vmem:[%s344] sm:$0x3]
      %v451 = vld [vmem:[#allocation4] sm:$0x3]
      %v452 = vld [vmem:[%s3] sm:$0xff]
      %v453 = vld [vmem:[%s3 + $0x8] sm:$0xff]
      %v455 = vsel %vm369, %v451, 0
      %457 = vmatpush.msra.mxu0 0.0
      %458 = vmatpush.msra.mxu0 0.0
      %459 = vmatpush.msra.mxu0 0.0
      %460 = vmatpush.msra.mxu0 0.0
      %461 = vmatpush.msra.mxu0 0.0
      %462 = vmatpush.msra.mxu0 0.0
      %463 = vmatpush.msra.mxu0 0.0
      %464 = vmatpush.msra.mxu0 0.0
      %465 = vmatpush.msra.mxu0 0.0
      %466 = vmatpush.msra.mxu0 0.0
      %467 = vmatpush.msra.mxu0 0.0
      %468 = vmatpush.msra.mxu0 0.0
      %469 = vmatpush.msra.mxu0 0.0
      %470 = vmatpush.msra.mxu0 0.0
      %471 = vmatpush.msra.mxu0 %v453
      %472 = vmatpush.msra.mxu0 %v452
      %473 = vmatmul.f32.gmra.mxu0 %v455
      %v474 = vpop.f32.mrf.mxu0
      %v475 = vadd.f32 0.0, %v474
      %476 = vdwg.mxu0
      %v477 = vadd.f32 %v450, %v475
      %v478 = vld [vmem:[#allocation5] sm:$0x3]
      %v479 = vxor.u32 %v477, 2147483648
      %v480 = vmul.f32 %v479, 1.442695
      %v481 = vpow.pop %v480
      %v482 = vadd.f32 %v481, 1.0
      %v483 = vrcp.pop %v482
      %v484 = vmul.f32 %v482, %v483
      %v485 = vsub.f32 1.0, %v484
      %v486 = vmul.f32 %v483, %v485
      %v487 = vadd.f32 %v483, %v486
      %vm488 = vweird.f32 %v482
      %vm489 = vweird.f32 %v483
      %vm490 = vmor %vm488, %vm489
      %v491 = vsel %vm490, %v483, %v487
      %v492 = vand.u32 2147483647, %v482
      %vm493 = vcmp.eq.f32.partialorder %v492, 8.507059e+37
      %v494 = vand.u32 %v482, 2147483648
      %v495 = vor.u32 1.1754944e-38, %v494
      %v496 = vsel %vm493, %v495, %v491
      %v497 = vmul.f32 1.0, %v496
      %v498 = vtanh.pop %v477
      %500 = vrot.lane.b32.xlu0 %v478, 16
      %v501 = vpop.permute.xlu0 %500
      %v503 = vmul.f32 %v497, %v501
      %505 = vrot.lane.b32.xlu0 %v498, 96
      %v506 = vpop.permute.xlu0 %505
      %v508 = vmul.f32 %v497, %v506
      %510 = vrot.lane.b32.xlu0 %v508, 16
      %v511 = vpop.permute.xlu0 %510
      %v513 = vadd.f32 %v503, %v511
      %v514 = vtanh.pop %v513
      %516 = vrot.lane.b32.xlu0 %v514, 32
      %v517 = vpop.permute.xlu0 %516
      %v519 = vmul.f32 %v497, %v517
      %521 = vrot.lane.b32.xlu0 %v519, 80
      %v522 = vpop.permute.xlu0 %521
      %524 = vst.msk [vmem:[#allocation4] sm:$0x3] %vm440, %v522
      %526 = vrot.lane.b32.xlu0 %v513, 112
      %v527 = vpop.permute.xlu0 %526
      %529 = vst.msk [vmem:[#allocation5] sm:$0x3] %vm440, %v527
      %530 = vst.msk [vmem:[%s354] sm:$0x3] %vm440, %v522
      %531 = vst.msk [vmem:[%s8] sm:$0x3] %vm440, %v522
      %532 = vst.msk [vmem:[%s9] sm:$0x3] %vm440, %v527
      %p533 = scmp.lt.s32.totalorder %s21, 7
      %s534 = scalar_select %p533, %s21, 7
      %s535 = smul.addr %s534, 2
      %s536 = scalar_lea.vmem %s4, %s535
      %s537 = ssub.s32 7, %s21
      %p538 = scmp.lt.s32.totalorder %s537, 7
      %s539 = scalar_select %p538, %s537, 7
      %s540 = smul.addr %s539, 2
      %s541 = scalar_lea.vmem %s5, %s540
      // Predicated region
      $region41: #{seq2seq_forward.4} parent=35 // pred_check
        %p542 = pneg %p135
      $region42: #{seq2seq_forward.4} parent=35 // pred_check_branch
        %544 = sbr.rel (%p542) target = $region44
      $region43: #{seq2seq_forward.4} parent=35 // pred_region
        _
      $region44: #{seq2seq_forward.4} parent=35 // pred_fallthru
        _
      // Predicated region
      $region45: #{seq2seq_forward.4} parent=35 // pred_check
        %p545 = pneg %p163
      $region46: #{seq2seq_forward.4} parent=35 // pred_check_branch
        %547 = sbr.rel (%p545) target = $region48
      $region47: #{seq2seq_forward.4} parent=35 // pred_region
        %s548 = ssub.s32 7, %s21
      $region48: #{seq2seq_forward.4} parent=35 // pred_fallthru
        _
      // Predicated region
      $region49: #{seq2seq_forward.4} parent=35 // pred_check
        %p549 = pneg %p184
      $region50: #{seq2seq_forward.4} parent=35 // pred_check_branch
        %551 = sbr.rel (%p549) target = $region52
      $region51: #{seq2seq_forward.4} parent=35 // pred_region
        _
      $region52: #{seq2seq_forward.4} parent=35 // pred_fallthru
        _
      // Predicated region
      $region53: #{seq2seq_forward.4} parent=35 // pred_check
        %p552 = pneg %p205
      $region54: #{seq2seq_forward.4} parent=35 // pred_check_branch
        %554 = sbr.rel (%p552) target = $region56
      $region55: #{seq2seq_forward.4} parent=35 // pred_region
        _
      $region56: #{seq2seq_forward.4} parent=35 // pred_fallthru
        _
      // Predicated region
      $region57: #{seq2seq_forward.4} parent=35 // pred_check
        %p555 = pneg %p226
      $region58: #{seq2seq_forward.4} parent=35 // pred_check_branch
        %557 = sbr.rel (%p555) target = $region60
      $region59: #{seq2seq_forward.4} parent=35 // pred_region
        _
      $region60: #{seq2seq_forward.4} parent=35 // pred_fallthru
        _
      // Predicated region
      $region61: #{seq2seq_forward.4} parent=35 // pred_check
        %p558 = pneg %p247
      $region62: #{seq2seq_forward.4} parent=35 // pred_check_branch
        %560 = sbr.rel (%p558) target = $region64
      $region63: #{seq2seq_forward.4} parent=35 // pred_region
        _
      $region64: #{seq2seq_forward.4} parent=35 // pred_fallthru
        _
      // Predicated region
      $region65: #{seq2seq_forward.4} parent=35 // pred_check
        %p561 = pneg %p184
      $region66: #{seq2seq_forward.4} parent=35 // pred_check_branch
        %563 = sbr.rel (%p561) target = $region68
      $region67: #{seq2seq_forward.4} parent=35 // pred_region
        _
      $region68: #{seq2seq_forward.4} parent=35 // pred_fallthru
        _
      // Predicated region
      $region69: #{seq2seq_forward.4} parent=35 // pred_check
        %p564 = pneg %p205
      $region70: #{seq2seq_forward.4} parent=35 // pred_check_branch
        %566 = sbr.rel (%p564) target = $region72
      $region71: #{seq2seq_forward.4} parent=35 // pred_region
        _
      $region72: #{seq2seq_forward.4} parent=35 // pred_fallthru
        _
      // Predicated region
      $region73: #{seq2seq_forward.4} parent=35 // pred_check
        %p567 = pneg %p226
      $region74: #{seq2seq_forward.4} parent=35 // pred_check_branch
        %569 = sbr.rel (%p567) target = $region76
      $region75: #{seq2seq_forward.4} parent=35 // pred_region
        _
      $region76: #{seq2seq_forward.4} parent=35 // pred_fallthru
        _
      // Predicated region
      $region77: #{seq2seq_forward.4} parent=35 // pred_check
        %p570 = pneg %p247
      $region78: #{seq2seq_forward.4} parent=35 // pred_check_branch
        %572 = sbr.rel (%p570) target = $region80
      $region79: #{seq2seq_forward.4} parent=35 // pred_region
        _
      $region80: #{seq2seq_forward.4} parent=35 // pred_fallthru
        _
    $region36: #{seq2seq_forward.4} parent=5 // pred_fallthru
      _
    %p573 = scmp.le.s32.totalorder 2, %s16
    // Predicated region
    $region81: #{seq2seq_forward.4} parent=5 // pred_check
      %p574 = pneg %p573
    $region82: #{seq2seq_forward.4} parent=5 // pred_check_branch
      %576 = sbr.rel (%p574) target = $region84
    $region83: #{seq2seq_forward.4} parent=5 // pred_region
      %s577 = ssub.s32 %s16, 2
      // Predicated region
      $region85: #{seq2seq_forward.4} parent=83 // pred_check
        %p578 = pneg %p141
      $region86: #{seq2seq_forward.4} parent=83 // pred_check_branch
        %580 = sbr.rel (%p578) target = $region88
      $region87: #{seq2seq_forward.4} parent=83 // pred_region
        %p581 = scmp.lt.s32.totalorder %s22, 7
        %s582 = scalar_select %p581, %s22, 7
        %s583 = smul.addr %s582, 2
        %s584 = scalar_lea.vmem %s4, %s583
      $region88: #{seq2seq_forward.4} parent=83 // pred_fallthru
        _
      // Predicated region
      $region89: #{seq2seq_forward.4} parent=83 // pred_check
        %p585 = pneg %p169
      $region90: #{seq2seq_forward.4} parent=83 // pred_check_branch
        %587 = sbr.rel (%p585) target = $region92
      $region91: #{seq2seq_forward.4} parent=83 // pred_region
        %s588 = ssub.s32 7, %s22
        %p589 = scmp.lt.s32.totalorder %s588, 7
        %s590 = scalar_select %p589, %s588, 7
        %s591 = smul.addr %s590, 2
        %s592 = scalar_lea.vmem %s5, %s591
      $region92: #{seq2seq_forward.4} parent=83 // pred_fallthru
        _
    $region84: #{seq2seq_forward.4} parent=5 // pred_fallthru
      _
  $region6: #{seq2seq_forward.4} parent=0 // loop_footer
    %s20 = sadd.s32 1, %s16
  $region7: #{seq2seq_forward.4} parent=0 // loop_footer_branch
    %15 = sbr.rel target = $region3
  $region8: #{seq2seq_forward.4} parent=0 // loop_exit
    _

// kernel: seq2seq_forward.7
$region0: #{seq2seq_forward.7}
  #allocation0 [shape = 'u32[]', space=smem, size = 0x4, offset = 0x4, fixed_abs, tag = 'smem constant byte address 0x4 - core index']
  #allocation1 [shape = 'u32[72,128]{1,0:T(1,128)}', space=vmem, size = 0x9000, scoped, tag = 'internal scratch']
  %s0 = inlined_call_operand.vmem [shape: f32[12,32], index: 0, kind: input, shape index: {}]
  %s1 = inlined_call_operand.vmem [shape: f32[32,19], index: 1, kind: input, shape index: {}]
  %s2 = inlined_call_operand.vmem [shape: f32[1,19], index: 2, kind: input, shape index: {}]
  %s3 = inlined_call_operand.vmem [shape: f32[12,19], index: 3, kind: output, shape index: {}]
  %s4 = sld [smem:[#allocation0]]
  $region22: #{seq2seq_forward.7} parent=0
    _
  %s6 = ssub.s32 1, %s4
  %s7 = scalar_select 0, %s6, %s4
  // Predicated region
  $region2: #{seq2seq_forward.7} parent=0 // pred_check
    _
  $region3: #{seq2seq_forward.7} parent=0 // pred_check_branch
    %9 = sbr.rel (0) target = $region5
  $region4: #{seq2seq_forward.7} parent=0 // pred_region
    _
  $region5: #{seq2seq_forward.7} parent=0 // pred_fallthru
    _
  // Predicated region
  $region6: #{seq2seq_forward.7} parent=0 // pred_check
    _
  $region7: #{seq2seq_forward.7} parent=0 // pred_check_branch
    %11 = sbr.rel (0) target = $region9
  $region8: #{seq2seq_forward.7} parent=0 // pred_region
    _
  $region9: #{seq2seq_forward.7} parent=0 // pred_fallthru
    _
  // Predicated region
  $region10: #{seq2seq_forward.7} parent=0 // pred_check
    _
  $region11: #{seq2seq_forward.7} parent=0 // pred_check_branch
    %13 = sbr.rel (0) target = $region13
  $region12: #{seq2seq_forward.7} parent=0 // pred_region
    _
  $region13: #{seq2seq_forward.7} parent=0 // pred_fallthru
    _
  %v14 = vld [vmem:[%s0] sm:$0xff]
  %v15 = vld [vmem:[%s0 + $0x8] sm:$0xf]
  %v16 = vld [vmem:[%s1] sm:$0xff]
  %v17 = vld [vmem:[%s1 + $0x8] sm:$0xff]
  %v18 = vld [vmem:[%s1 + $0x10] sm:$0xff]
  %v19 = vld [vmem:[%s1 + $0x18] sm:$0xff]
  %v20 = vld [vmem:[%s2] sm:$0x1]
  %v22 = vperm.slane %v20, 0
  %vm24 = vcmask 261120
  %v26 = vsel %vm24, %v14, 0
  %v29 = vsel %vm24, %v15, 0
  %31 = vmatpush.msra.mxu0 0.0
  %32 = vmatpush.msra.mxu0 0.0
  %33 = vmatpush.msra.mxu0 0.0
  %34 = vmatpush.msra.mxu0 0.0
  %35 = vmatpush.msra.mxu0 0.0
  %36 = vmatpush.msra.mxu0 0.0
  %37 = vmatpush.msra.mxu0 0.0
  %38 = vmatpush.msra.mxu0 0.0
  %39 = vmatpush.msra.mxu0 0.0
  %40 = vmatpush.msra.mxu0 0.0
  %41 = vmatpush.msra.mxu0 0.0
  %42 = vmatpush.msra.mxu0 0.0
  %43 = vmatpush.msra.mxu0 %v19
  %44 = vmatpush.msra.mxu0 %v18
  %45 = vmatpush.msra.mxu0 %v17
  %46 = vmatpush.msra.mxu0 %v16
  %47 = vmatmul.f32.gmra.mxu0 %v26
  %v48 = vpop.f32.mrf.mxu0
  %v49 = vadd.f32 %v22, %v48
  %50 = vmatmul.f32.gmra.mxu0 %v29
  %v51 = vpop.f32.mrf.mxu0
  %v52 = vadd.f32 %v22, %v51
  %53 = vdwg.mxu0
  %vm54 = vcmask 154624
  %v55 = vsel %vm54, %v49, -inf
  %56 = vmax.xlane.f32.xlu0 %v55
  %v57 = vpop.xlane.xlu0 %56
  %vm58 = vcmask 150528
  %v59 = vsel %vm58, %v52, -inf
  %60 = vmax.xlane.f32.xlu0 %v59
  %v61 = vpop.xlane.xlu0 %60
  %v62 = vsub.f32 %v49, %v57
  %v63 = vsub.f32 %v52, %v61
  %v64 = vmul.f32 %v62, 1.442695
  %v65 = vpow.pop %v64
  %v66 = vmul.f32 %v63, 1.442695
  %v67 = vpow.pop %v66
  %v68 = vsel %vm54, %v65, 0.0
  %69 = vadd.xlane.f32.xlu0 %v68
  %v70 = vpop.xlane.xlu0 %69
  %v71 = vsel %vm58, %v67, 0.0
  %72 = vadd.xlane.f32.xlu0 %v71
  %v73 = vpop.xlane.xlu0 %72
  %v74 = vlog2.pop %v70
  %v75 = vmul.f32 %v74, 0.6931472
  %v76 = vlog2.pop %v73
  %v77 = vmul.f32 %v76, 0.6931472
  %v78 = vadd.f32 %v75, %v57
  %v79 = vadd.f32 %v77, %v61
  %v80 = vsub.f32 %v49, %v78
  %v81 = vsub.f32 %v52, %v79
  %82 = vst.msk [vmem:[%s3] sm:$0xff] %vm54, %v80
  %83 = vst.msk [vmem:[%s3 + $0x8] sm:$0xf] %vm58, %v81
  // Predicated region
  $region14: #{seq2seq_forward.7} parent=0 // pred_check
    _
  $region15: #{seq2seq_forward.7} parent=0 // pred_check_branch
    %85 = sbr.rel (0) target = $region17
  $region16: #{seq2seq_forward.7} parent=0 // pred_region
    _
  $region17: #{seq2seq_forward.7} parent=0 // pred_fallthru
    _
  // Predicated region
  $region18: #{seq2seq_forward.7} parent=0 // pred_check
    _
  $region19: #{seq2seq_forward.7} parent=0 // pred_check_branch
    %87 = sbr.rel (0) target = $region21
  $region20: #{seq2seq_forward.7} parent=0 // pred_region
    _
  $region21: #{seq2seq_forward.7} parent=0 // pred_fallthru
    _

// kernel: seq2seq_forward.6
$region0: #{seq2seq_forward.6}
  #allocation0 [shape = 'u32[]', space=smem, size = 0x4, offset = 0x4, fixed_abs, tag = 'smem constant byte address 0x4 - core index']
  #allocation1 [shape = 'u32[72,128]{1,0:T(1,128)}', space=vmem, size = 0x9000, scoped, tag = 'internal scratch']
  #allocation2 [shape = 'f32[2,2,32]{2,1,0:T(2,128)}', space=vmem, size = 0x800, scoped, tag = 'scratch operand']
  #allocation3 [shape = 'f32[2,2,32]{2,1,0:T(2,128)}', space=vmem, size = 0x800, scoped, tag = 'scratch operand']
  #allocation4 [shape = 'f32[2,32]{1,0:T(2,128)}', space=vmem, size = 0x400, scoped, tag = 'scratch operand']
  %s0 = inlined_call_operand.vmem [shape: f32[6,2,128], index: 0, kind: input, shape index: {}]
  %s1 = inlined_call_operand.vmem [shape: f32[2,8,32], index: 1, kind: input, shape index: {}]
  %s2 = inlined_call_operand.vmem [shape: f32[32,128], index: 2, kind: input, shape index: {}]
  %s3 = inlined_call_operand.vmem [shape: f32[2,32,128], index: 3, kind: input, shape index: {}]
  %s4 = inlined_call_operand.vmem [shape: f32[1,32,128], index: 4, kind: input, shape index: {}]
  %s5 = inlined_call_operand.vmem [shape: f32[1,1,128], index: 5, kind: input, shape index: {}]
  %s6 = inlined_call_operand.vmem [shape: f32[2,2,32], index: 6, kind: input, shape index: {}]
  %s7 = inlined_call_operand.vmem [shape: f32[2,2,32], index: 7, kind: input, shape index: {}]
  %s8 = inlined_call_operand.vmem [shape: f32[32,32], index: 8, kind: input, shape index: {}]
  %s9 = inlined_call_operand.vmem [shape: f32[32,32], index: 9, kind: input, shape index: {}]
  %s10 = inlined_call_operand.vmem [shape: f32[32,32], index: 10, kind: input, shape index: {}]
  %s11 = inlined_call_operand.vmem [shape: f32[1,32], index: 11, kind: input, shape index: {}]
  %s12 = inlined_call_operand.vmem [shape: f32[6,2,32], index: 12, kind: output, shape index: {}]
  %s13 = sld [smem:[#allocation0]]
  $region85: #{seq2seq_forward.6} parent=0
    _
  %s15 = ssub.s32 1, %s13
  %s16 = scalar_select 0, %s15, %s13
  loop: start=0, step=1, limit=8
  $region2: #{seq2seq_forward.6} parent=0 // loop_pre_header
    _
  $region3: #{seq2seq_forward.6} parent=0 // loop_header
    %s18 = sphi 0, %s22
    %p19 = scmp.ge.s32.totalorder %s18, 8
    %s28 = sphi 0, %s30
    %s31 = sphi 0, %s28
    %s32 = sphi 0, %s31
    %s48 = sphi 0, %s32
    %s52 = sphi 0, %s52
    %s54 = sphi 0, %s52
    %s55 = sphi 0, %s54
    %s69 = sphi 0, %s55
    %s73 = sphi 0, %s73
    %s75 = sphi 0, %s73
    %s76 = sphi 0, %s75
    %s90 = sphi 0, %s76
    %s94 = sphi 0, %s94
    %s96 = sphi 0, %s94
    %s97 = sphi 0, %s96
    %s111 = sphi 0, %s97
    %s115 = sphi 0, %s115
    %s117 = sphi 0, %s115
    %s118 = sphi 0, %s117
    %s132 = sphi 0, %s118
    %s136 = sphi 0, %s136
    %s138 = sphi 0, %s136
    %s139 = sphi 0, %s138
    %s153 = sphi 0, %s139
    %s157 = sphi 0, %s157
    %s159 = sphi 0, %s157
    %s160 = sphi 0, %s159
    %s174 = sphi 0, %s160
    %s178 = sphi 0, %s178
    %s180 = sphi 0, %s178
    %s181 = sphi 0, %s180
    %s195 = sphi 0, %s181
    %s199 = sphi 0, %s199
    %s201 = sphi 0, %s199
    %s202 = sphi 0, %s201
    %s216 = sphi 0, %s202
    %s220 = sphi 0, %s220
    %s222 = sphi 0, %s220
    %s223 = sphi 0, %s222
    %s237 = sphi 0, %s223
    %s241 = sphi 0, %s241
    %s243 = sphi 0, %s241
    %s244 = sphi 0, %s243
    %s258 = sphi 0, %s244
    %s262 = sphi 0, %s262
    %s264 = sphi 0, %s262
    %s265 = sphi 0, %s264
    %s279 = sphi 0, %s265
    %s285 = sphi 0, %s287
    %s288 = sphi 0, %s285
    %s289 = sphi 0, %s288
    %s305 = sphi 0, %s289
  $region4: #{seq2seq_forward.6} parent=0 // loop_header_branch
    %21 = sbr.rel (%p19) target = $region8
  $region5: #{seq2seq_forward.6} parent=0 // loop_body
    %s23 = ssub.s32 %s18, 1
    %s24 = ssub.s32 %s18, 2
    %s25 = sadd.s32 %s18, 1
    %s26 = ssub.s32 %s18, %s25
    %p27 = scmp.eq.s32.totalorder %s26, 0
    %s29 = sadd.s32 %s28, 1
    %s30 = scalar_select %p27, %s28, %s29
    %p33 = pneg %p27
    %p34 = scmp.eq.s32.totalorder %s18, 5
    %p35 = por %p33, %p34
    %p36 = scmp.ne.s32.totalorder %s28, %s31
    %p37 = scmp.eq.s32.totalorder %s18, 0
    %p38 = por %p36, %p37
    %p39 = scmp.ne.s32.totalorder %s28, %s31
    %p40 = scmp.eq.s32.totalorder %s23, 5
    %p41 = por %p39, %p40
    %p42 = scmp.ne.s32.totalorder %s31, %s32
    %p43 = scmp.eq.s32.totalorder %s23, 0
    %p44 = por %p42, %p43
    %p45 = scmp.ne.s32.totalorder %s31, %s32
    %p46 = scmp.eq.s32.totalorder %s24, 5
    %p47 = por %p45, %p46
    %p49 = scmp.ne.s32.totalorder %s32, %s48
    %p50 = scmp.eq.s32.totalorder %s24, 0
    %p51 = por %p49, %p50
    %s53 = sadd.s32 %s52, 1
    %p56 = scmp.eq.s32.totalorder %s18, 5
    %p57 = scmp.ne.s32.totalorder %s52, %s54
    %p58 = scmp.eq.s32.totalorder %s18, 0
    %p59 = por %p57, %p58
    %p60 = scmp.ne.s32.totalorder %s52, %s54
    %p61 = scmp.eq.s32.totalorder %s23, 5
    %p62 = por %p60, %p61
    %p63 = scmp.ne.s32.totalorder %s54, %s55
    %p64 = scmp.eq.s32.totalorder %s23, 0
    %p65 = por %p63, %p64
    %p66 = scmp.ne.s32.totalorder %s54, %s55
    %p67 = scmp.eq.s32.totalorder %s24, 5
    %p68 = por %p66, %p67
    %p70 = scmp.ne.s32.totalorder %s55, %s69
    %p71 = scmp.eq.s32.totalorder %s24, 0
    %p72 = por %p70, %p71
    %s74 = sadd.s32 %s73, 1
    %p77 = scmp.eq.s32.totalorder %s18, 5
    %p78 = scmp.ne.s32.totalorder %s73, %s75
    %p79 = scmp.eq.s32.totalorder %s18, 0
    %p80 = por %p78, %p79
    %p81 = scmp.ne.s32.totalorder %s73, %s75
    %p82 = scmp.eq.s32.totalorder %s23, 5
    %p83 = por %p81, %p82
    %p84 = scmp.ne.s32.totalorder %s75, %s76
    %p85 = scmp.eq.s32.totalorder %s23, 0
    %p86 = por %p84, %p85
    %p87 = scmp.ne.s32.totalorder %s75, %s76
    %p88 = scmp.eq.s32.totalorder %s24, 5
    %p89 = por %p87, %p88
    %p91 = scmp.ne.s32.totalorder %s76, %s90
    %p92 = scmp.eq.s32.totalorder %s24, 0
    %p93 = por %p91, %p92
    %s95 = sadd.s32 %s94, 1
    %p98 = scmp.eq.s32.totalorder %s18, 5
    %p99 = scmp.ne.s32.totalorder %s94, %s96
    %p100 = scmp.eq.s32.totalorder %s18, 0
    %p101 = por %p99, %p100
    %p102 = scmp.ne.s32.totalorder %s94, %s96
    %p103 = scmp.eq.s32.totalorder %s23, 5
    %p104 = por %p102, %p103
    %p105 = scmp.ne.s32.totalorder %s96, %s97
    %p106 = scmp.eq.s32.totalorder %s23, 0
    %p107 = por %p105, %p106
    %p108 = scmp.ne.s32.totalorder %s96, %s97
    %p109 = scmp.eq.s32.totalorder %s24, 5
    %p110 = por %p108, %p109
    %p112 = scmp.ne.s32.totalorder %s97, %s111
    %p113 = scmp.eq.s32.totalorder %s24, 0
    %p114 = por %p112, %p113
    %s116 = sadd.s32 %s115, 1
    %p119 = scmp.eq.s32.totalorder %s18, 5
    %p120 = scmp.ne.s32.totalorder %s115, %s117
    %p121 = scmp.eq.s32.totalorder %s18, 0
    %p122 = por %p120, %p121
    %p123 = scmp.ne.s32.totalorder %s115, %s117
    %p124 = scmp.eq.s32.totalorder %s23, 5
    %p125 = por %p123, %p124
    %p126 = scmp.ne.s32.totalorder %s117, %s118
    %p127 = scmp.eq.s32.totalorder %s23, 0
    %p128 = por %p126, %p127
    %p129 = scmp.ne.s32.totalorder %s117, %s118
    %p130 = scmp.eq.s32.totalorder %s24, 5
    %p131 = por %p129, %p130
    %p133 = scmp.ne.s32.totalorder %s118, %s132
    %p134 = scmp.eq.s32.totalorder %s24, 0
    %p135 = por %p133, %p134
    %s137 = sadd.s32 %s136, 1
    %p140 = scmp.eq.s32.totalorder %s18, 5
    %p141 = scmp.ne.s32.totalorder %s136, %s138
    %p142 = scmp.eq.s32.totalorder %s18, 0
    %p143 = por %p141, %p142
    %p144 = scmp.ne.s32.totalorder %s136, %s138
    %p145 = scmp.eq.s32.totalorder %s23, 5
    %p146 = por %p144, %p145
    %p147 = scmp.ne.s32.totalorder %s138, %s139
    %p148 = scmp.eq.s32.totalorder %s23, 0
    %p149 = por %p147, %p148
    %p150 = scmp.ne.s32.totalorder %s138, %s139
    %p151 = scmp.eq.s32.totalorder %s24, 5
    %p152 = por %p150, %p151
    %p154 = scmp.ne.s32.totalorder %s139, %s153
    %p155 = scmp.eq.s32.totalorder %s24, 0
    %p156 = por %p154, %p155
    %s158 = sadd.s32 %s157, 1
    %p161 = scmp.eq.s32.totalorder %s18, 5
    %p162 = scmp.ne.s32.totalorder %s157, %s159
    %p163 = scmp.eq.s32.totalorder %s18, 0
    %p164 = por %p162, %p163
    %p165 = scmp.ne.s32.totalorder %s157, %s159
    %p166 = scmp.eq.s32.totalorder %s23, 5
    %p167 = por %p165, %p166
    %p168 = scmp.ne.s32.totalorder %s159, %s160
    %p169 = scmp.eq.s32.totalorder %s23, 0
    %p170 = por %p168, %p169
    %p171 = scmp.ne.s32.totalorder %s159, %s160
    %p172 = scmp.eq.s32.totalorder %s24, 5
    %p173 = por %p171, %p172
    %p175 = scmp.ne.s32.totalorder %s160, %s174
    %p176 = scmp.eq.s32.totalorder %s24, 0
    %p177 = por %p175, %p176
    %s179 = sadd.s32 %s178, 1
    %p182 = scmp.eq.s32.totalorder %s18, 5
    %p183 = scmp.ne.s32.totalorder %s178, %s180
    %p184 = scmp.eq.s32.totalorder %s18, 0
    %p185 = por %p183, %p184
    %p186 = scmp.ne.s32.totalorder %s178, %s180
    %p187 = scmp.eq.s32.totalorder %s23, 5
    %p188 = por %p186, %p187
    %p189 = scmp.ne.s32.totalorder %s180, %s181
    %p190 = scmp.eq.s32.totalorder %s23, 0
    %p191 = por %p189, %p190
    %p192 = scmp.ne.s32.totalorder %s180, %s181
    %p193 = scmp.eq.s32.totalorder %s24, 5
    %p194 = por %p192, %p193
    %p196 = scmp.ne.s32.totalorder %s181, %s195
    %p197 = scmp.eq.s32.totalorder %s24, 0
    %p198 = por %p196, %p197
    %s200 = sadd.s32 %s199, 1
    %p203 = scmp.eq.s32.totalorder %s18, 5
    %p204 = scmp.ne.s32.totalorder %s199, %s201
    %p205 = scmp.eq.s32.totalorder %s18, 0
    %p206 = por %p204, %p205
    %p207 = scmp.ne.s32.totalorder %s199, %s201
    %p208 = scmp.eq.s32.totalorder %s23, 5
    %p209 = por %p207, %p208
    %p210 = scmp.ne.s32.totalorder %s201, %s202
    %p211 = scmp.eq.s32.totalorder %s23, 0
    %p212 = por %p210, %p211
    %p213 = scmp.ne.s32.totalorder %s201, %s202
    %p214 = scmp.eq.s32.totalorder %s24, 5
    %p215 = por %p213, %p214
    %p217 = scmp.ne.s32.totalorder %s202, %s216
    %p218 = scmp.eq.s32.totalorder %s24, 0
    %p219 = por %p217, %p218
    %s221 = sadd.s32 %s220, 1
    %p224 = scmp.eq.s32.totalorder %s18, 5
    %p225 = scmp.ne.s32.totalorder %s220, %s222
    %p226 = scmp.eq.s32.totalorder %s18, 0
    %p227 = por %p225, %p226
    %p228 = scmp.ne.s32.totalorder %s220, %s222
    %p229 = scmp.eq.s32.totalorder %s23, 5
    %p230 = por %p228, %p229
    %p231 = scmp.ne.s32.totalorder %s222, %s223
    %p232 = scmp.eq.s32.totalorder %s23, 0
    %p233 = por %p231, %p232
    %p234 = scmp.ne.s32.totalorder %s222, %s223
    %p235 = scmp.eq.s32.totalorder %s24, 5
    %p236 = por %p234, %p235
    %p238 = scmp.ne.s32.totalorder %s223, %s237
    %p239 = scmp.eq.s32.totalorder %s24, 0
    %p240 = por %p238, %p239
    %s242 = sadd.s32 %s241, 1
    %p245 = scmp.eq.s32.totalorder %s18, 5
    %p246 = scmp.ne.s32.totalorder %s241, %s243
    %p247 = scmp.eq.s32.totalorder %s18, 0
    %p248 = por %p246, %p247
    %p249 = scmp.ne.s32.totalorder %s241, %s243
    %p250 = scmp.eq.s32.totalorder %s23, 5
    %p251 = por %p249, %p250
    %p252 = scmp.ne.s32.totalorder %s243, %s244
    %p253 = scmp.eq.s32.totalorder %s23, 0
    %p254 = por %p252, %p253
    %p255 = scmp.ne.s32.totalorder %s243, %s244
    %p256 = scmp.eq.s32.totalorder %s24, 5
    %p257 = por %p255, %p256
    %p259 = scmp.ne.s32.totalorder %s244, %s258
    %p260 = scmp.eq.s32.totalorder %s24, 0
    %p261 = por %p259, %p260
    %s263 = sadd.s32 %s262, 1
    %p266 = scmp.eq.s32.totalorder %s18, 5
    %p267 = scmp.ne.s32.totalorder %s262, %s264
    %p268 = scmp.eq.s32.totalorder %s18, 0
    %p269 = por %p267, %p268
    %p270 = scmp.ne.s32.totalorder %s262, %s264
    %p271 = scmp.eq.s32.totalorder %s23, 5
    %p272 = por %p270, %p271
    %p273 = scmp.ne.s32.totalorder %s264, %s265
    %p274 = scmp.eq.s32.totalorder %s23, 0
    %p275 = por %p273, %p274
    %p276 = scmp.ne.s32.totalorder %s264, %s265
    %p277 = scmp.eq.s32.totalorder %s24, 5
    %p278 = por %p276, %p277
    %p280 = scmp.ne.s32.totalorder %s265, %s279
    %p281 = scmp.eq.s32.totalorder %s24, 0
    %p282 = por %p280, %p281
    %s283 = ssub.s32 %s18, %s25
    %p284 = scmp.eq.s32.totalorder %s283, 0
    %s286 = sadd.s32 %s285, 1
    %s287 = scalar_select %p284, %s285, %s286
    %p290 = pneg %p284
    %p291 = scmp.eq.s32.totalorder %s18, 5
    %p292 = por %p290, %p291
    %p293 = scmp.ne.s32.totalorder %s285, %s288
    %p294 = scmp.eq.s32.totalorder %s18, 0
    %p295 = por %p293, %p294
    %p296 = scmp.ne.s32.totalorder %s285, %s288
    %p297 = scmp.eq.s32.totalorder %s23, 5
    %p298 = por %p296, %p297
    %p299 = scmp.ne.s32.totalorder %s288, %s289
    %p300 = scmp.eq.s32.totalorder %s23, 0
    %p301 = por %p299, %p300
    %p302 = scmp.ne.s32.totalorder %s288, %s289
    %p303 = scmp.eq.s32.totalorder %s24, 5
    %p304 = por %p302, %p303
    %p306 = scmp.ne.s32.totalorder %s289, %s305
    %p307 = scmp.eq.s32.totalorder %s24, 0
    %p308 = por %p306, %p307
    %p309 = scmp.le.s32.totalorder 1, %s18
    %p310 = scmp.lt.s32.totalorder %s18, 7
    %p311 = pnand %p309, %p310
    %p312 = pneg %p311
    // Predicated region
    $region9: #{seq2seq_forward.6} parent=5 // pred_check
      _
    $region10: #{seq2seq_forward.6} parent=5 // pred_check_branch
      %314 = sbr.rel (%p311) target = $region12
    $region11: #{seq2seq_forward.6} parent=5 // pred_region
      %s315 = ssub.s32 %s18, 1
      // Predicated region
      $region13: #{seq2seq_forward.6} parent=11 // pred_check
        %p316 = pneg %p65
      $region14: #{seq2seq_forward.6} parent=11 // pred_check_branch
        %318 = sbr.rel (%p316) target = $region16
      $region15: #{seq2seq_forward.6} parent=11 // pred_region
        _
      $region16: #{seq2seq_forward.6} parent=11 // pred_fallthru
        _
      // Predicated region
      $region17: #{seq2seq_forward.6} parent=11 // pred_check
        %p319 = pneg %p86
      $region18: #{seq2seq_forward.6} parent=11 // pred_check_branch
        %321 = sbr.rel (%p319) target = $region20
      $region19: #{seq2seq_forward.6} parent=11 // pred_region
        _
      $region20: #{seq2seq_forward.6} parent=11 // pred_fallthru
        _
      // Predicated region
      $region21: #{seq2seq_forward.6} parent=11 // pred_check
        %p322 = pneg %p107
      $region22: #{seq2seq_forward.6} parent=11 // pred_check_branch
        %324 = sbr.rel (%p322) target = $region24
      $region23: #{seq2seq_forward.6} parent=11 // pred_region
        _
      $region24: #{seq2seq_forward.6} parent=11 // pred_fallthru
        _
      // Predicated region
      $region25: #{seq2seq_forward.6} parent=11 // pred_check
        %p325 = pneg %p128
      $region26: #{seq2seq_forward.6} parent=11 // pred_check_branch
        %327 = sbr.rel (%p325) target = $region28
      $region27: #{seq2seq_forward.6} parent=11 // pred_region
        _
      $region28: #{seq2seq_forward.6} parent=11 // pred_fallthru
        _
      // Predicated region
      $region29: #{seq2seq_forward.6} parent=11 // pred_check
        %p328 = pneg %p149
      $region30: #{seq2seq_forward.6} parent=11 // pred_check_branch
        %330 = sbr.rel (%p328) target = $region32
      $region31: #{seq2seq_forward.6} parent=11 // pred_region
        _
      $region32: #{seq2seq_forward.6} parent=11 // pred_fallthru
        _
      // Predicated region
      $region33: #{seq2seq_forward.6} parent=11 // pred_check
        %p331 = pneg %p170
      $region34: #{seq2seq_forward.6} parent=11 // pred_check_branch
        %333 = sbr.rel (%p331) target = $region36
      $region35: #{seq2seq_forward.6} parent=11 // pred_region
        _
      $region36: #{seq2seq_forward.6} parent=11 // pred_fallthru
        _
      // Predicated region
      $region37: #{seq2seq_forward.6} parent=11 // pred_check
        %p334 = pneg %p191
      $region38: #{seq2seq_forward.6} parent=11 // pred_check_branch
        %336 = sbr.rel (%p334) target = $region40
      $region39: #{seq2seq_forward.6} parent=11 // pred_region
        _
      $region40: #{seq2seq_forward.6} parent=11 // pred_fallthru
        _
      // Predicated region
      $region41: #{seq2seq_forward.6} parent=11 // pred_check
        %p337 = pneg %p212
      $region42: #{seq2seq_forward.6} parent=11 // pred_check_branch
        %339 = sbr.rel (%p337) target = $region44
      $region43: #{seq2seq_forward.6} parent=11 // pred_region
        _
      $region44: #{seq2seq_forward.6} parent=11 // pred_fallthru
        _
      // Predicated region
      $region45: #{seq2seq_forward.6} parent=11 // pred_check
        %p340 = pneg %p233
      $region46: #{seq2seq_forward.6} parent=11 // pred_check_branch
        %342 = sbr.rel (%p340) target = $region48
      $region47: #{seq2seq_forward.6} parent=11 // pred_region
        _
      $region48: #{seq2seq_forward.6} parent=11 // pred_fallthru
        _
      // Predicated region
      $region49: #{seq2seq_forward.6} parent=11 // pred_check
        %p343 = pneg %p254
      $region50: #{seq2seq_forward.6} parent=11 // pred_check_branch
        %345 = sbr.rel (%p343) target = $region52
      $region51: #{seq2seq_forward.6} parent=11 // pred_region
        _
      $region52: #{seq2seq_forward.6} parent=11 // pred_fallthru
        _
      // Predicated region
      $region53: #{seq2seq_forward.6} parent=11 // pred_check
        %p346 = pneg %p275
      $region54: #{seq2seq_forward.6} parent=11 // pred_check_branch
        %348 = sbr.rel (%p346) target = $region56
      $region55: #{seq2seq_forward.6} parent=11 // pred_region
        _
      $region56: #{seq2seq_forward.6} parent=11 // pred_fallthru
        _
    $region12: #{seq2seq_forward.6} parent=5 // pred_fallthru
      _
    %p349 = scmp.lt.s32.totalorder %s18, 6
    // Predicated region
    $region57: #{seq2seq_forward.6} parent=5 // pred_check
      %p350 = pneg %p349
    $region58: #{seq2seq_forward.6} parent=5 // pred_check_branch
      %352 = sbr.rel (%p350) target = $region60
    $region59: #{seq2seq_forward.6} parent=5 // pred_region
      // Predicated region
      $region61: #{seq2seq_forward.6} parent=59 // pred_check
        %p353 = pneg %p38
      $region62: #{seq2seq_forward.6} parent=59 // pred_check_branch
        %355 = sbr.rel (%p353) target = $region64
      $region63: #{seq2seq_forward.6} parent=59 // pred_region
        %p356 = scmp.lt.s32.totalorder %s18, 5
        %s357 = scalar_select %p356, %s18, 5
        %s358 = smul.addr %s357, 2
        %s359 = scalar_lea.vmem %s0, %s358
      $region64: #{seq2seq_forward.6} parent=59 // pred_fallthru
        _
    $region60: #{seq2seq_forward.6} parent=5 // pred_fallthru
      _
    %p360 = scmp.le.s32.totalorder 1, %s18
    %p361 = scmp.lt.s32.totalorder %s18, 7
    %p362 = pnand %p360, %p361
    %p363 = pneg %p362
    // Predicated region
    $region65: #{seq2seq_forward.6} parent=5 // pred_check
      _
    $region66: #{seq2seq_forward.6} parent=5 // pred_check_branch
      %365 = sbr.rel (%p362) target = $region68
    $region67: #{seq2seq_forward.6} parent=5 // pred_region
      %s366 = ssub.s32 %s18, 1
      %p367 = scmp.lt.s32.totalorder %s23, 5
      %s368 = scalar_select %p367, %s23, 5
      %s369 = smul.addr %s368, 2
      %s370 = scalar_lea.vmem %s0, %s369
      %p371 = pneg %p44
      %p372 = pneg %p41
      %p373 = pneg %p65
      %p374 = pneg %p62
      %p375 = pneg %p86
      %p376 = pneg %p83
      %p377 = pneg %p107
      %p378 = pneg %p104
      %p379 = pneg %p128
      %p380 = pneg %p125
      %p381 = pneg %p149
      %p382 = pneg %p146
      %p383 = pneg %p170
      %p384 = pneg %p167
      %p385 = pneg %p191
      %p386 = pneg %p188
      %p387 = pneg %p212
      %p388 = pneg %p209
      %p389 = pneg %p233
      %p390 = pneg %p230
      %p391 = pneg %p254
      %p392 = pneg %p251
      %p393 = pneg %p275
      %p394 = pneg %p272
      %p395 = pneg %p301
      %p396 = pneg %p298
      %p397 = scmp.lt.s32.totalorder %s23, 5
      %s398 = scalar_select %p397, %s23, 5
      %s399 = smul.addr %s398, 2
      %s400 = scalar_lea.vmem %s12, %s399
      %p401 = scmp.lt.s32.totalorder %s23, 5
      %s402 = scalar_select %p401, %s23, 5
      %s403 = smul.addr %s402, 2
      %s404 = scalar_lea.vmem %s0, %s403
      %p405 = scmp.lt.s32.totalorder %s23, 5
      %s406 = scalar_select %p405, %s23, 5
      %s407 = smul.addr %s406, 2
      %s408 = scalar_lea.vmem %s12, %s407
      %p409 = scmp.eq.s32.totalorder %s23, 0
      // Predicated region
      $region69: #{seq2seq_forward.6} parent=67 // pred_check
        %p410 = pneg %p409
      $region70: #{seq2seq_forward.6} parent=67 // pred_check_branch
        %412 = sbr.rel (%p410) target = $region72
      $region71: #{seq2seq_forward.6} parent=67 // pred_region
        %v413 = vld [vmem:[%s6] sm:$0x3]
        %v414 = vld [vmem:[%s6 + $0x2] sm:$0x3]
        %vm415 = vcmask 254976
        %416 = vst.msk [vmem:[#allocation2] sm:$0x3] %vm415, %v413
        %417 = vst.msk [vmem:[#allocation2 + $0x2] sm:$0x3] %vm415, %v414
        %v418 = vld [vmem:[%s7] sm:$0x3]
        %v419 = vld [vmem:[%s7 + $0x2] sm:$0x3]
        %420 = vst.msk [vmem:[#allocation3] sm:$0x3] %vm415, %v418
        %421 = vst.msk [vmem:[#allocation3 + $0x2] sm:$0x3] %vm415, %v419
        %422 = vst.msk [vmem:[#allocation4] sm:$0x3] %vm415, 0.0
      $region72: #{seq2seq_forward.6} parent=67 // pred_fallthru
        _
      %v423 = vld [vmem:[%s404] sm:$0x3]
      %v424 = vld [vmem:[#allocation4] sm:$0x3]
      %v425 = vld [vmem:[%s2] sm:$0xff]
      %v426 = vld [vmem:[%s2 + $0x8] sm:$0xff]
      %v427 = vld [vmem:[%s2 + $0x10] sm:$0xff]
      %v428 = vld [vmem:[%s2 + $0x18] sm:$0xff]
      %vm429 = vcmask 261120
      %v431 = vsel %vm429, %v424, 0
      %433 = vmatpush.msra.mxu0 0.0
      %434 = vmatpush.msra.mxu0 0.0
      %435 = vmatpush.msra.mxu0 0.0
      %436 = vmatpush.msra.mxu0 0.0
      %437 = vmatpush.msra.mxu0 0.0
      %438 = vmatpush.msra.mxu0 0.0
      %439 = vmatpush.msra.mxu0 0.0
      %440 = vmatpush.msra.mxu0 0.0
      %441 = vmatpush.msra.mxu0 0.0
      %442 = vmatpush.msra.mxu0 0.0
      %443 = vmatpush.msra.mxu0 0.0
      %444 = vmatpush.msra.mxu0 0.0
      %445 = vmatpush.msra.mxu0 %v428
      %446 = vmatpush.msra.mxu0 %v427
      %447 = vmatpush.msra.mxu0 %v426
      %448 = vmatpush.msra.mxu0 %v425
      %449 = vmatmul.f32.gmra.mxu0 %v431
      %v450 = vpop.f32.mrf.mxu0
      %v451 = vadd.f32 0.0, %v450
      %452 = vdwg.mxu0
      %v453 = vadd.f32 %v423, %v451
      %v454 = vld [vmem:[#allocation2] sm:$0x3]
      %v455 = vld [vmem:[%s3] sm:$0xff]
      %v456 = vld [vmem:[%s3 + $0x8] sm:$0xff]
      %v457 = vld [vmem:[%s3 + $0x10] sm:$0xff]
      %v458 = vld [vmem:[%s3 + $0x18] sm:$0xff]
      %v460 = vsel %vm429, %v454, 0
      %462 = vmatpush.msra.mxu0 0.0
      %463 = vmatpush.msra.mxu0 0.0
      %464 = vmatpush.msra.mxu0 0.0
      %465 = vmatpush.msra.mxu0 0.0
      %466 = vmatpush.msra.mxu0 0.0
      %467 = vmatpush.msra.mxu0 0.0
      %468 = vmatpush.msra.mxu0 0.0
      %469 = vmatpush.msra.mxu0 0.0
      %470 = vmatpush.msra.mxu0 0.0
      %471 = vmatpush.msra.mxu0 0.0
      %472 = vmatpush.msra.mxu0 0.0
      %473 = vmatpush.msra.mxu0 0.0
      %474 = vmatpush.msra.mxu0 %v458
      %475 = vmatpush.msra.mxu0 %v457
      %476 = vmatpush.msra.mxu0 %v456
      %477 = vmatpush.msra.mxu0 %v455
      %478 = vmatmul.f32.gmra.mxu0 %v460
      %v479 = vpop.f32.mrf.mxu0
      %v480 = vadd.f32 0.0, %v479
      %481 = vdwg.mxu0
      %v482 = vadd.f32 %v453, %v480
      %v483 = vld [vmem:[#allocation3] sm:$0x3]
      %v484 = vxor.u32 %v482, 2147483648
      %v485 = vmul.f32 %v484, 1.442695
      %v486 = vpow.pop %v485
      %v487 = vadd.f32 %v486, 1.0
      %v488 = vrcp.pop %v487
      %v489 = vmul.f32 %v487, %v488
      %v490 = vsub.f32 1.0, %v489
      %v491 = vmul.f32 %v488, %v490
      %v492 = vadd.f32 %v488, %v491
      %vm493 = vweird.f32 %v487
      %vm494 = vweird.f32 %v488
      %vm495 = vmor %vm493, %vm494
      %v496 = vsel %vm495, %v488, %v492
      %v497 = vand.u32 2147483647, %v487
      %vm498 = vcmp.eq.f32.partialorder %v497, 8.507059e+37
      %v499 = vand.u32 %v487, 2147483648
      %v500 = vor.u32 1.1754944e-38, %v499
      %v501 = vsel %vm498, %v500, %v496
      %v502 = vmul.f32 1.0, %v501
      %v503 = vtanh.pop %v482
      %505 = vrot.lane.b32.xlu0 %v483, 32
      %v506 = vpop.permute.xlu0 %505
      %v508 = vmul.f32 %v502, %v506
      %510 = vrot.lane.b32.xlu0 %v503, 64
      %v511 = vpop.permute.xlu0 %510
      %v513 = vmul.f32 %v502, %v511
      %515 = vrot.lane.b32.xlu0 %v513, 32
      %v516 = vpop.permute.xlu0 %515
      %v518 = vadd.f32 %v508, %v516
      %v519 = vtanh.pop %v518
      %521 = vrot.lane.b32.xlu0 %v519, 64
      %v522 = vpop.permute.xlu0 %521
      %v524 = vmul.f32 %v502, %v522
      %526 = vrot.lane.b32.xlu0 %v524, 32
      %v527 = vpop.permute.xlu0 %526
      %vm529 = vcmask 254976
      %530 = vst.msk [vmem:[#allocation2] sm:$0x3] %vm529, %v527
      %532 = vrot.lane.b32.xlu0 %v518, 96
      %v533 = vpop.permute.xlu0 %532
      %535 = vst.msk [vmem:[#allocation3] sm:$0x3] %vm529, %v533
      %v536 = vld [vmem:[%s4] sm:$0xff]
      %v537 = vld [vmem:[%s4 + $0x8] sm:$0xff]
      %v538 = vld [vmem:[%s4 + $0x10] sm:$0xff]
      %v539 = vld [vmem:[%s4 + $0x18] sm:$0xff]
      %s540 = scalar_lea.vmem [#allocation2], 2
      %v541 = vld [vmem:[%s540] sm:$0x3]
      %s542 = scalar_lea.vmem %s3, 32
      %v543 = vld [vmem:[%s542] sm:$0xff]
      %v544 = vld [vmem:[%s542 + $0x8] sm:$0xff]
      %v545 = vld [vmem:[%s542 + $0x10] sm:$0xff]
      %v546 = vld [vmem:[%s542 + $0x18] sm:$0xff]
      %v548 = vsel %vm429, %v541, 0
      %550 = vmatpush.msra.mxu0 0.0
      %551 = vmatpush.msra.mxu0 0.0
      %552 = vmatpush.msra.mxu0 0.0
      %553 = vmatpush.msra.mxu0 0.0
      %554 = vmatpush.msra.mxu0 0.0
      %555 = vmatpush.msra.mxu0 0.0
      %556 = vmatpush.msra.mxu0 0.0
      %557 = vmatpush.msra.mxu0 0.0
      %558 = vmatpush.msra.mxu0 0.0
      %559 = vmatpush.msra.mxu0 0.0
      %560 = vmatpush.msra.mxu0 0.0
      %561 = vmatpush.msra.mxu0 0.0
      %562 = vmatpush.msra.mxu0 %v546
      %563 = vmatpush.msra.mxu0 %v545
      %564 = vmatpush.msra.mxu0 %v544
      %565 = vmatpush.msra.mxu0 %v543
      %566 = vmatmul.f32.gmra.mxu0 %v548
      %v567 = vpop.f32.mrf.mxu0
      %v568 = vadd.f32 0.0, %v567
      %569 = vdwg.mxu0
      %v570 = vsel %vm429, %v527, 0
      %572 = vmatpush.msra.mxu0 0.0
      %573 = vmatpush.msra.mxu0 0.0
      %574 = vmatpush.msra.mxu0 0.0
      %575 = vmatpush.msra.mxu0 0.0
      %576 = vmatpush.msra.mxu0 0.0
      %577 = vmatpush.msra.mxu0 0.0
      %578 = vmatpush.msra.mxu0 0.0
      %579 = vmatpush.msra.mxu0 0.0
      %580 = vmatpush.msra.mxu0 0.0
      %581 = vmatpush.msra.mxu0 0.0
      %582 = vmatpush.msra.mxu0 0.0
      %583 = vmatpush.msra.mxu0 0.0
      %584 = vmatpush.msra.mxu0 %v539
      %585 = vmatpush.msra.mxu0 %v538
      %586 = vmatpush.msra.mxu0 %v537
      %587 = vmatpush.msra.mxu0 %v536
      %588 = vmatmul.f32.gmra.mxu0 %v570
      %v589 = vpop.f32.mrf.mxu0
      %v590 = vadd.f32 %v568, %v589
      %591 = vdwg.mxu0
      %v592 = vld [vmem:[%s5] sm:$0x1]
      %v594 = vperm.slane %v592, 0
      %v596 = vadd.f32 %v590, %v594
      %s597 = scalar_lea.vmem [#allocation3], 2
      %v598 = vld [vmem:[%s597] sm:$0x3]
      %v599 = vxor.u32 %v596, 2147483648
      %v600 = vmul.f32 %v599, 1.442695
      %v601 = vpow.pop %v600
      %v602 = vadd.f32 %v601, 1.0
      %v603 = vrcp.pop %v602
      %v604 = vmul.f32 %v602, %v603
      %v605 = vsub.f32 1.0, %v604
      %v606 = vmul.f32 %v603, %v605
      %v607 = vadd.f32 %v603, %v606
      %vm608 = vweird.f32 %v602
      %vm609 = vweird.f32 %v603
      %vm610 = vmor %vm608, %vm609
      %v611 = vsel %vm610, %v603, %v607
      %v612 = vand.u32 2147483647, %v602
      %vm613 = vcmp.eq.f32.partialorder %v612, 8.507059e+37
      %v614 = vand.u32 %v602, 2147483648
      %v615 = vor.u32 1.1754944e-38, %v614
      %v616 = vsel %vm613, %v615, %v611
      %v617 = vmul.f32 1.0, %v616
      %v618 = vtanh.pop %v596
      %620 = vrot.lane.b32.xlu0 %v598, 32
      %v621 = vpop.permute.xlu0 %620
      %v623 = vmul.f32 %v617, %v621
      %625 = vrot.lane.b32.xlu0 %v618, 64
      %v626 = vpop.permute.xlu0 %625
      %v628 = vmul.f32 %v617, %v626
      %630 = vrot.lane.b32.xlu0 %v628, 32
      %v631 = vpop.permute.xlu0 %630
      %v633 = vadd.f32 %v623, %v631
      %v634 = vtanh.pop %v633
      %636 = vrot.lane.b32.xlu0 %v634, 64
      %v637 = vpop.permute.xlu0 %636
      %v639 = vmul.f32 %v617, %v637
      %641 = vrot.lane.b32.xlu0 %v639, 32
      %v642 = vpop.permute.xlu0 %641
      %644 = vst.msk [vmem:[%s540] sm:$0x3] %vm529, %v642
      %646 = vrot.lane.b32.xlu0 %v633, 96
      %v647 = vpop.permute.xlu0 %646
      %649 = vst.msk [vmem:[%s597] sm:$0x3] %vm529, %v647
      %v650 = vld [vmem:[%s1] sm:$0xff]
      %v651 = vld [vmem:[%s1 + $0x8] sm:$0xff]
      %v652 = vld [vmem:[%s8] sm:$0xff]
      %v653 = vld [vmem:[%s8 + $0x8] sm:$0xff]
      %v654 = vld [vmem:[%s8 + $0x10] sm:$0xff]
      %v655 = vld [vmem:[%s8 + $0x18] sm:$0xff]
      %v656 = vsel %vm429, %v642, 0
      %658 = vmatpush.msra.mxu0 0.0
      %659 = vmatpush.msra.mxu0 0.0
      %660 = vmatpush.msra.mxu0 0.0
      %661 = vmatpush.msra.mxu0 0.0
      %662 = vmatpush.msra.mxu0 0.0
      %663 = vmatpush.msra.mxu0 0.0
      %664 = vmatpush.msra.mxu0 0.0
      %665 = vmatpush.msra.mxu0 0.0
      %666 = vmatpush.msra.mxu0 0.0
      %667 = vmatpush.msra.mxu0 0.0
      %668 = vmatpush.msra.mxu0 0.0
      %669 = vmatpush.msra.mxu0 0.0
      %670 = vmatpush.msra.mxu0 %v655
      %671 = vmatpush.msra.mxu0 %v654
      %672 = vmatpush.msra.mxu0 %v653
      %673 = vmatpush.msra.mxu0 %v652
      %674 = vmatmul.f32.gmra.mxu0 %v656
      %v675 = vpop.f32.mrf.mxu0
      %v676 = vadd.f32 0.0, %v675
      %677 = vdwg.mxu0
      %v679 = vrot.slane %v676, 1
      %v680 = vsel %vm429, %v676, 0
      %v683 = vsel %vm429, %v650, 0
      %685 = vmatpush.xpose.msra.mxu0 0.0
      %686 = vmatpush.xpose.msra.mxu0 0.0
      %687 = vmatpush.xpose.msra.mxu0 0.0
      %688 = vmatpush.xpose.msra.mxu0 0.0
      %689 = vmatpush.xpose.msra.mxu0 0.0
      %690 = vmatpush.xpose.msra.mxu0 0.0
      %691 = vmatpush.xpose.msra.mxu0 0.0
      %692 = vmatpush.xpose.msra.mxu0 0.0
      %693 = vmatpush.xpose.msra.mxu0 0.0
      %694 = vmatpush.xpose.msra.mxu0 0.0
      %695 = vmatpush.xpose.msra.mxu0 0.0
      %696 = vmatpush.xpose.msra.mxu0 0.0
      %697 = vmatpush.xpose.msra.mxu0 0.0
      %698 = vmatpush.xpose.msra.mxu0 0.0
      %699 = vmatpush.xpose.msra.mxu0 0.0
      %700 = vmatpush.xpose.msra.mxu0 %v683
      %701 = vmatmul.f32.gmra.mxu0 %v680
      %v702 = vpop.f32.mrf.mxu0
      %v703 = vadd.f32 0.0, %v702
      %704 = vdwg.mxu0
      %v705 = vsel %vm429, %v679, 0
      %v708 = vsel %vm429, %v651, 0
      %710 = vmatpush.xpose.msra.mxu0 0.0
      %711 = vmatpush.xpose.msra.mxu0 0.0
      %712 = vmatpush.xpose.msra.mxu0 0.0
      %713 = vmatpush.xpose.msra.mxu0 0.0
      %714 = vmatpush.xpose.msra.mxu0 0.0
      %715 = vmatpush.xpose.msra.mxu0 0.0
      %716 = vmatpush.xpose.msra.mxu0 0.0
      %717 = vmatpush.xpose.msra.mxu0 0.0
      %718 = vmatpush.xpose.msra.mxu0 0.0
      %719 = vmatpush.xpose.msra.mxu0 0.0
      %720 = vmatpush.xpose.msra.mxu0 0.0
      %721 = vmatpush.xpose.msra.mxu0 0.0
      %722 = vmatpush.xpose.msra.mxu0 0.0
      %723 = vmatpush.xpose.msra.mxu0 0.0
      %724 = vmatpush.xpose.msra.mxu0 0.0
      %725 = vmatpush.xpose.msra.mxu0 %v708
      %726 = vmatmul.f32.gmra.mxu0 %v705
      %v727 = vpop.f32.mrf.mxu0
      %v728 = vadd.f32 0.0, %v727
      %729 = vdwg.mxu0
      %vm730 = vcmask 57344
      %v731 = vsel %vm730, %v703, -inf
      %732 = vmax.xlane.f32.xlu0 %v731
      %v733 = vpop.xlane.xlu0 %732
      %v734 = vsel %vm730, %v728, -inf
      %735 = vmax.xlane.f32.xlu0 %v734
      %v736 = vpop.xlane.xlu0 %735
      %v737 = vsub.f32 %v703, %v733
      %v738 = vsub.f32 %v728, %v736
      %v739 = vmul.f32 %v737, 1.442695
      %v740 = vpow.pop %v739
      %v741 = vmul.f32 %v738, 1.442695
      %v742 = vpow.pop %v741
      %v743 = vsel %vm730, %v740, 0.0
      %744 = vadd.xlane.f32.xlu0 %v743
      %v745 = vpop.xlane.xlu0 %744
      %v746 = vsel %vm730, %v742, 0.0
      %747 = vadd.xlane.f32.xlu0 %v746
      %v748 = vpop.xlane.xlu0 %747
      %v749 = vrcp.pop %v745
      %v750 = vrcp.pop %v748
      %v751 = vmul.f32 %v740, %v749
      %v752 = vmul.f32 %v742, %v750
      %vm753 = vcmask 64512
      %v755 = vsel %vm753, %v751, 0
      %757 = vmatpush.msra.mxu0 0.0
      %758 = vmatpush.msra.mxu0 0.0
      %759 = vmatpush.msra.mxu0 0.0
      %760 = vmatpush.msra.mxu0 0.0
      %761 = vmatpush.msra.mxu0 0.0
      %762 = vmatpush.msra.mxu0 0.0
      %763 = vmatpush.msra.mxu0 0.0
      %764 = vmatpush.msra.mxu0 0.0
      %765 = vmatpush.msra.mxu0 0.0
      %766 = vmatpush.msra.mxu0 0.0
      %767 = vmatpush.msra.mxu0 0.0
      %768 = vmatpush.msra.mxu0 0.0
      %769 = vmatpush.msra.mxu0 0.0
      %770 = vmatpush.msra.mxu0 0.0
      %771 = vmatpush.msra.mxu0 0.0
      %772 = vmatpush.msra.mxu0 %v650
      %773 = vmatmul.f32.gmra.mxu0 %v755
      %v774 = vpop.f32.mrf.mxu0
      %v775 = vadd.f32 0.0, %v774
      %776 = vdwg.mxu0
      %v778 = vsel %vm753, %v752, 0
      %780 = vmatpush.msra.mxu0 0.0
      %781 = vmatpush.msra.mxu0 0.0
      %782 = vmatpush.msra.mxu0 0.0
      %783 = vmatpush.msra.mxu0 0.0
      %784 = vmatpush.msra.mxu0 0.0
      %785 = vmatpush.msra.mxu0 0.0
      %786 = vmatpush.msra.mxu0 0.0
      %787 = vmatpush.msra.mxu0 0.0
      %788 = vmatpush.msra.mxu0 0.0
      %789 = vmatpush.msra.mxu0 0.0
      %790 = vmatpush.msra.mxu0 0.0
      %791 = vmatpush.msra.mxu0 0.0
      %792 = vmatpush.msra.mxu0 0.0
      %793 = vmatpush.msra.mxu0 0.0
      %794 = vmatpush.msra.mxu0 0.0
      %795 = vmatpush.msra.mxu0 %v651
      %796 = vmatmul.f32.gmra.mxu0 %v778
      %v797 = vpop.f32.mrf.mxu0
      %v798 = vadd.f32 0.0, %v797
      %799 = vdwg.mxu0
      %v800 = vld [vmem:[%s9] sm:$0xff]
      %v801 = vld [vmem:[%s9 + $0x8] sm:$0xff]
      %v802 = vld [vmem:[%s9 + $0x10] sm:$0xff]
      %v803 = vld [vmem:[%s9 + $0x18] sm:$0xff]
      %v804 = vld [vmem:[%s10] sm:$0xff]
      %v805 = vld [vmem:[%s10 + $0x8] sm:$0xff]
      %v806 = vld [vmem:[%s10 + $0x10] sm:$0xff]
      %v807 = vld [vmem:[%s10 + $0x18] sm:$0xff]
      %v810 = vrot.slane %v798, 7
      %vm811 = vcmask 1041409
      %v812 = vsel %vm811, %v810, %v775
      %v813 = vsel %vm429, %v812, 0
      %815 = vmatpush.msra.mxu0 0.0
      %816 = vmatpush.msra.mxu0 0.0
      %817 = vmatpush.msra.mxu0 0.0
      %818 = vmatpush.msra.mxu0 0.0
      %819 = vmatpush.msra.mxu0 0.0
      %820 = vmatpush.msra.mxu0 0.0
      %821 = vmatpush.msra.mxu0 0.0
      %822 = vmatpush.msra.mxu0 0.0
      %823 = vmatpush.msra.mxu0 0.0
      %824 = vmatpush.msra.mxu0 0.0
      %825 = vmatpush.msra.mxu0 0.0
      %826 = vmatpush.msra.mxu0 0.0
      %827 = vmatpush.msra.mxu0 %v807
      %828 = vmatpush.msra.mxu0 %v806
      %829 = vmatpush.msra.mxu0 %v805
      %830 = vmatpush.msra.mxu0 %v804
      %831 = vmatmul.f32.gmra.mxu0 %v813
      %v832 = vpop.f32.mrf.mxu0
      %v833 = vadd.f32 0.0, %v832
      %834 = vdwg.mxu0
      %835 = vmatpush.msra.mxu0 0.0
      %836 = vmatpush.msra.mxu0 0.0
      %837 = vmatpush.msra.mxu0 0.0
      %838 = vmatpush.msra.mxu0 0.0
      %839 = vmatpush.msra.mxu0 0.0
      %840 = vmatpush.msra.mxu0 0.0
      %841 = vmatpush.msra.mxu0 0.0
      %842 = vmatpush.msra.mxu0 0.0
      %843 = vmatpush.msra.mxu0 0.0
      %844 = vmatpush.msra.mxu0 0.0
      %845 = vmatpush.msra.mxu0 0.0
      %846 = vmatpush.msra.mxu0 0.0
      %847 = vmatpush.msra.mxu0 %v803
      %848 = vmatpush.msra.mxu0 %v802
      %849 = vmatpush.msra.mxu0 %v801
      %850 = vmatpush.msra.mxu0 %v800
      %851 = vmatmul.f32.gmra.mxu0 %v656
      %v852 = vpop.f32.mrf.mxu0
      %v853 = vadd.f32 %v833, %v852
      %854 = vdwg.mxu0
      %v855 = vld [vmem:[%s11] sm:$0x1]
      %v857 = vperm.slane %v855, 0
      %v859 = vadd.f32 %v853, %v857
      %v860 = vtanh.pop %v859
      %861 = vst.msk [vmem:[#allocation4] sm:$0x3] %vm529, %v860
      %862 = vst.msk [vmem:[%s408] sm:$0x3] %vm529, %v860
      %p863 = scmp.lt.s32.totalorder %s23, 5
      %s864 = scalar_select %p863, %s23, 5
      %s865 = smul.addr %s864, 2
      %s866 = scalar_lea.vmem %s12, %s865
      // Predicated region
      $region73: #{seq2seq_forward.6} parent=67 // pred_check
        %p867 = pneg %p298
      $region74: #{seq2seq_forward.6} parent=67 // pred_check_branch
        %869 = sbr.rel (%p867) target = $region76
      $region75: #{seq2seq_forward.6} parent=67 // pred_region
        _
      $region76: #{seq2seq_forward.6} parent=67 // pred_fallthru
        _
    $region68: #{seq2seq_forward.6} parent=5 // pred_fallthru
      _
    %p870 = scmp.le.s32.totalorder 2, %s18
    // Predicated region
    $region77: #{seq2seq_forward.6} parent=5 // pred_check
      %p871 = pneg %p870
    $region78: #{seq2seq_forward.6} parent=5 // pred_check_branch
      %873 = sbr.rel (%p871) target = $region80
    $region79: #{seq2seq_forward.6} parent=5 // pred_region
      %s874 = ssub.s32 %s18, 2
      // Predicated region
      $region81: #{seq2seq_forward.6} parent=79 // pred_check
        %p875 = pneg %p304
      $region82: #{seq2seq_forward.6} parent=79 // pred_check_branch
        %877 = sbr.rel (%p875) target = $region84
      $region83: #{seq2seq_forward.6} parent=79 // pred_region
        %p878 = scmp.lt.s32.totalorder %s24, 5
        %s879 = scalar_select %p878, %s24, 5
        %s880 = smul.addr %s879, 2
        %s881 = scalar_lea.vmem %s12, %s880
      $region84: #{seq2seq_forward.6} parent=79 // pred_fallthru
        _
    $region80: #{seq2seq_forward.6} parent=5 // pred_fallthru
      _
  $region6: #{seq2seq_forward.6} parent=0 // loop_footer
    %s22 = sadd.s32 1, %s18
  $region7: #{seq2seq_forward.6} parent=0 // loop_footer_branch
    %17 = sbr.rel target = $region3
  $region8: #{seq2seq_forward.6} parent=0 // loop_exit
    _

</llo_original>
